<compile_context>
chip_gen: v7x
topology: tpu7x:2x2x1
jax: 0.10.0
libtpu: 0.0.40
codegen_flags: <defaults>
</compile_context>

<pallas_src>
import math

import jax
import jax.numpy as jnp
from jax.experimental import pallas as pl
from jax.experimental.pallas import tpu as pltpu

BN_EPS = 0.8          # BatchNorm1d(out_feat, 0.8) -> 2nd positional arg is eps
LRELU_SLOPE = 0.2
LANE = 128
HIDDEN = 1024         # trunk output width


def _round_up(x, m):
    return (x + m - 1) // m * m


def _leaky_relu(x):
    return jnp.where(x > 0, x, LRELU_SLOPE * x)


def _bn_leaky_relu(x, gamma, beta):
    # Training-mode BatchNorm1d: batch mean, biased batch variance, eps=0.8.
    # One-pass statistics + fused scale/shift, then LeakyReLU(0.2).
    inv_n = 1.0 / x.shape[0]
    s1 = jnp.sum(x, axis=0, keepdims=True)
    s2 = jnp.sum(x * x, axis=0, keepdims=True)
    mean = s1 * inv_n
    var = s2 * inv_n - mean * mean                 # biased variance
    scale = gamma * jax.lax.rsqrt(var + BN_EPS)    # (1, D) fused scale
    shift = beta - mean * scale                    # (1, D) fused shift
    return _leaky_relu(x * scale + shift)


def trunk_kernel(z_ref,
                 w1_ref, b1_ref,
                 w2_ref, g2_ref, bt2_ref,
                 w3_ref, g3_ref, bt3_ref,
                 w4_ref, g4_ref, bt4_ref,
                 h_ref):
    # block(latent, 128, normalize=False)
    h = _leaky_relu(
        jnp.dot(z_ref[...].astype(w1_ref.dtype), w1_ref[...],
                preferred_element_type=jnp.float32) + b1_ref[...])
    # block(128, 256)  -- pre-BN bias dropped (BN mean-subtraction cancels it)
    h = _bn_leaky_relu(
        jnp.dot(h.astype(w2_ref.dtype), w2_ref[...],
                preferred_element_type=jnp.float32),
        g2_ref[...], bt2_ref[...])
    # block(256, 512)
    h = _bn_leaky_relu(
        jnp.dot(h.astype(w3_ref.dtype), w3_ref[...],
                preferred_element_type=jnp.float32),
        g3_ref[...], bt3_ref[...])
    # block(512, 1024)
    h = _bn_leaky_relu(
        jnp.dot(h.astype(w4_ref.dtype), w4_ref[...],
                preferred_element_type=jnp.float32),
        g4_ref[...], bt4_ref[...])
    # Emit bf16: feeds the head MXU directly (same precision as the previous
    # in-kernel cast) and halves h's HBM/VMEM traffic.
    h_ref[...] = h.astype(h_ref.dtype)


def head_kernel(h_ref, wh_ref, bh_ref, out_ref):
    # One column tile of the fused node|edge head: h @ wh_tile + bh_tile, tanh.
    # Padded columns have zero weight/bias -> tanh(0) = 0, sliced off outside.
    out_ref[...] = jnp.tanh(
        jnp.dot(h_ref[...], wh_ref[...], preferred_element_type=jnp.float32)
        + bh_ref[...])


def _pick_head_tile(head_out):
    # 1024-wide tiles (2 MiB bf16, 4 MiB double-buffered) for big heads; for
    # tiny heads just use one lane-aligned tile.
    if head_out <= 1024:
        return _round_up(head_out, LANE)
    return 1024


def _uniform_linear_params(key, fan_in, fan_out):
    # deterministic, torch-Linear-like init: U(-1/sqrt(fan_in), 1/sqrt(fan_in))
    kw, kb = jax.random.split(key)
    bound = 1.0 / math.sqrt(fan_in)
    w = jax.random.uniform(kw, (fan_in, fan_out), jnp.float32, -bound, bound)
    b = jax.random.uniform(kb, (1, fan_out), jnp.float32, -bound, bound)
    return w, b


def make_generator_params(key, max_nodes_in_graph, node_dim, edge_dim, latent_dim):
    node_out = node_dim * max_nodes_in_graph
    # comb(n+1, 2) - n == n*(n-1)/2
    edge_out = edge_dim * (math.comb(max_nodes_in_graph + 1, 2) - max_nodes_in_graph)
    head_out = node_out + edge_out
    tn = _pick_head_tile(head_out)
    head_pad = _round_up(head_out, tn)

    keys = jax.random.split(key, 6)
    w1, b1 = _uniform_linear_params(keys[0], latent_dim, 128)
    w2, _b2 = _uniform_linear_params(keys[1], 128, 256)     # bias cancelled by BN
    w3, _b3 = _uniform_linear_params(keys[2], 256, 512)     # bias cancelled by BN
    w4, _b4 = _uniform_linear_params(keys[3], 512, HIDDEN)  # bias cancelled by BN
    wn, bn = _uniform_linear_params(keys[4], HIDDEN, node_out)
    we, be = _uniform_linear_params(keys[5], HIDDEN, edge_out)

    # Fuse node_nn | edge_nn into a single lane-dense head, zero-padded to a
    # multiple of the head column-tile width.
    wh = jnp.zeros((HIDDEN, head_pad), jnp.float32)
    wh = wh.at[:, :node_out].set(wn).at[:, node_out:head_out].set(we)
    bh = jnp.zeros((1, head_pad), jnp.float32)
    bh = bh.at[:, :node_out].set(bn).at[:, node_out:head_out].set(be)

    # BatchNorm affine params (gamma=1, beta=0), shaped (1, D) for broadcasting
    g2, bt2 = jnp.ones((1, 256), jnp.float32), jnp.zeros((1, 256), jnp.float32)
    g3, bt3 = jnp.ones((1, 512), jnp.float32), jnp.zeros((1, 512), jnp.float32)
    g4, bt4 = jnp.ones((1, HIDDEN), jnp.float32), jnp.zeros((1, HIDDEN), jnp.float32)

    bf16 = jnp.bfloat16
    params = (w1.astype(bf16), b1,
              w2.astype(bf16), g2, bt2,
              w3.astype(bf16), g3, bt3,
              w4.astype(bf16), g4, bt4,
              wh.astype(bf16), bh)
    meta = (node_out, edge_out)
    return params, meta


def generator_forward(z, params, node_out, edge_out):
    batch = z.shape[0]
    trunk_params = params[:11]
    wh, bh = params[11], params[12]
    head_pad = wh.shape[1]
    tn = _pick_head_tile(node_out + edge_out)
    assert head_pad % tn == 0
    n_tiles = head_pad // tn

    vmem_spec = pl.BlockSpec(memory_space=pltpu.MemorySpace.VMEM)

    # ---------------- trunk: z -> h (batch, 1024) bf16, gridless ------------
    trunk_bytes = (int(z.nbytes)
                   + sum(int(p.nbytes) for p in trunk_params)
                   + batch * HIDDEN * 2            # bf16 h output
                   + 3 * batch * HIDDEN * 4)       # f32 working activations
    trunk_vmem = int(min(max(2 * trunk_bytes, 8 << 20), 48 << 20))
    h = pl.pallas_call(
        trunk_kernel,
        out_shape=jax.ShapeDtypeStruct((batch, HIDDEN), jnp.bfloat16),
        in_specs=[vmem_spec] * (1 + len(trunk_params)),
        out_specs=vmem_spec,
        compiler_params=pltpu.CompilerParams(vmem_limit_bytes=trunk_vmem),
    )(z, *trunk_params)

    # ------- head: column-tiled fused node|edge matmul + tanh ---------------
    # h stays resident (block index always (0,0)); wh/bh/out tiles stream and
    # double-buffer; grid axis is "parallel" so v7x's 2 TCs split the columns.
    head_bytes = (batch * HIDDEN * 2                 # resident h
                  + 2 * (HIDDEN * tn * 2 + tn * 4)   # double-buffered wh/bh tiles
                  + 2 * batch * tn * 4               # double-buffered out tiles
                  + batch * tn * 4)                  # f32 accumulator / tanh temp
    head_vmem = int(min(max(2 * head_bytes, 8 << 20), 48 << 20))
    # TODO(synk): emit the head output in bf16 if downstream tolerates it
    # (halves output writeback HBM traffic); kept f32 to match the reference.
    head = pl.pallas_call(
        head_kernel,
        out_shape=jax.ShapeDtypeStruct((batch, head_pad), jnp.float32),
        grid=(n_tiles,),
        in_specs=[
            pl.BlockSpec((batch, HIDDEN), lambda j: (0, 0)),
            pl.BlockSpec((HIDDEN, tn), lambda j: (0, j)),
            pl.BlockSpec((1, tn), lambda j: (0, j)),
        ],
        out_specs=pl.BlockSpec((batch, tn), lambda j: (0, j)),
        compiler_params=pltpu.CompilerParams(
            dimension_semantics=("parallel",),
            vmem_limit_bytes=head_vmem),
    )(h, wh, bh)

    nodes = head[:, :node_out]
    edges = head[:, node_out:node_out + edge_out]
    return nodes, edges


if __name__ == "__main__":
    max_nodes_in_graph = 4
    node_dim = 3
    edge_dim = 2
    latent_dim = 8
    batch = 8

    key = jax.random.PRNGKey(0)
    k_params, k_z = jax.random.split(key)
    params, (node_out, edge_out) = make_generator_params(
        k_params, max_nodes_in_graph, node_dim, edge_dim, latent_dim)
    z = jax.random.normal(k_z, (batch, latent_dim), jnp.float32)

    nodes, edges = generator_forward(z, params, node_out, edge_out)
    jax.block_until_ready((nodes, edges))

    expected_node_out = node_dim * max_nodes_in_graph
    expected_edge_out = edge_dim * (math.comb(max_nodes_in_graph + 1, 2)
                                    - max_nodes_in_graph)
    assert nodes.shape == (batch, expected_node_out), nodes.shape
    assert edges.shape == (batch, expected_edge_out), edges.shape
    assert bool(jnp.all(jnp.isfinite(nodes))) and bool(jnp.all(jnp.isfinite(edges)))
    assert bool(jnp.all(jnp.abs(nodes) <= 1.0)) and bool(jnp.all(jnp.abs(edges) <= 1.0))

    print("KERNEL_OK")
</pallas_src>

<mosaic_0001>
module attributes {stable_mosaic.version = 11 : i64} {
  func.func @trunk_kernel(%arg0: memref<8x8xf32, #tpu.memory_space<vmem>>, %arg1: memref<8x128xbf16, #tpu.memory_space<vmem>>, %arg2: memref<1x128xf32, #tpu.memory_space<vmem>>, %arg3: memref<128x256xbf16, #tpu.memory_space<vmem>>, %arg4: memref<1x256xf32, #tpu.memory_space<vmem>>, %arg5: memref<1x256xf32, #tpu.memory_space<vmem>>, %arg6: memref<256x512xbf16, #tpu.memory_space<vmem>>, %arg7: memref<1x512xf32, #tpu.memory_space<vmem>>, %arg8: memref<1x512xf32, #tpu.memory_space<vmem>>, %arg9: memref<512x1024xbf16, #tpu.memory_space<vmem>>, %arg10: memref<1x1024xf32, #tpu.memory_space<vmem>>, %arg11: memref<1x1024xf32, #tpu.memory_space<vmem>>, %arg12: memref<8x1024xbf16, #tpu.memory_space<vmem>>) attributes {dimension_semantics = [], scalar_prefetch = 0 : i64, scratch_operands = 0 : i64, tpu.core_type = #tpu.core_type<tc>} {
    %c0 = arith.constant 0 : index
    %c0_0 = arith.constant 0 : index
    %0 = vector.load %arg0[%c0, %c0_0] : memref<8x8xf32, #tpu.memory_space<vmem>>, vector<8x8xf32>
    %1 = arith.truncf %0 : vector<8x8xf32> to vector<8x8xbf16>
    %c0_1 = arith.constant 0 : index
    %c0_2 = arith.constant 0 : index
    %2 = vector.load %arg1[%c0_1, %c0_2] : memref<8x128xbf16, #tpu.memory_space<vmem>>, vector<8x128xbf16>
    %cst = arith.constant dense<0.000000e+00> : vector<8x128xf32>
    %3 = tpu.matmul %1, %2, %cst {dimension_numbers = #tpu.dot_dimension_numbers<[1], [0], [0], [1], [0, 0, 1, 1], [], []>} : vector<8x8xbf16>, vector<8x128xbf16>, vector<8x128xf32> -> vector<8x128xf32>
    %c0_3 = arith.constant 0 : index
    %c0_4 = arith.constant 0 : index
    %4 = vector.load %arg2[%c0_3, %c0_4] : memref<1x128xf32, #tpu.memory_space<vmem>>, vector<1x128xf32>
    %5 = vector.broadcast %4 : vector<1x128xf32> to vector<8x128xf32>
    %6 = arith.addf %3, %5 : vector<8x128xf32>
    %cst_5 = arith.constant 0.000000e+00 : f32
    %7 = vector.broadcast %cst_5 : f32 to vector<8x128xf32>
    %8 = arith.cmpf ogt, %6, %7 : vector<8x128xf32>
    %cst_6 = arith.constant 2.000000e-01 : f32
    %9 = vector.broadcast %cst_6 : f32 to vector<8x128xf32>
    %10 = arith.mulf %9, %6 : vector<8x128xf32>
    %11 = arith.select %8, %6, %10 : vector<8x128xi1>, vector<8x128xf32>
    %12 = arith.truncf %11 : vector<8x128xf32> to vector<8x128xbf16>
    %c0_7 = arith.constant 0 : index
    %c0_8 = arith.constant 0 : index
    %13 = vector.load %arg3[%c0_7, %c0_8] : memref<128x256xbf16, #tpu.memory_space<vmem>>, vector<128x256xbf16>
    %cst_9 = arith.constant dense<0.000000e+00> : vector<8x256xf32>
    %14 = tpu.matmul %12, %13, %cst_9 {dimension_numbers = #tpu.dot_dimension_numbers<[1], [0], [0], [1], [0, 0, 1, 1], [], []>} : vector<8x128xbf16>, vector<128x256xbf16>, vector<8x256xf32> -> vector<8x256xf32>
    %c0_10 = arith.constant 0 : index
    %c0_11 = arith.constant 0 : index
    %15 = vector.load %arg4[%c0_10, %c0_11] : memref<1x256xf32, #tpu.memory_space<vmem>>, vector<1x256xf32>
    %c0_12 = arith.constant 0 : index
    %c0_13 = arith.constant 0 : index
    %16 = vector.load %arg5[%c0_12, %c0_13] : memref<1x256xf32, #tpu.memory_space<vmem>>, vector<1x256xf32>
    %cst_14 = arith.constant dense<0.000000e+00> : vector<256xf32>
    %17 = vector.multi_reduction <add>, %14, %cst_14 [0] : vector<8x256xf32> to vector<256xf32>
    %18 = vector.shape_cast %17 : vector<256xf32> to vector<1x256xf32>
    %19 = arith.mulf %14, %14 : vector<8x256xf32>
    %cst_15 = arith.constant dense<0.000000e+00> : vector<256xf32>
    %20 = vector.multi_reduction <add>, %19, %cst_15 [0] : vector<8x256xf32> to vector<256xf32>
    %21 = vector.shape_cast %20 : vector<256xf32> to vector<1x256xf32>
    %cst_16 = arith.constant 1.250000e-01 : f32
    %22 = vector.broadcast %cst_16 : f32 to vector<1x256xf32>
    %23 = arith.mulf %18, %22 : vector<1x256xf32>
    %cst_17 = arith.constant 1.250000e-01 : f32
    %24 = vector.broadcast %cst_17 : f32 to vector<1x256xf32>
    %25 = arith.mulf %21, %24 : vector<1x256xf32>
    %26 = arith.mulf %23, %23 : vector<1x256xf32>
    %27 = arith.subf %25, %26 : vector<1x256xf32>
    %cst_18 = arith.constant 8.000000e-01 : f32
    %28 = vector.broadcast %cst_18 : f32 to vector<1x256xf32>
    %29 = arith.addf %27, %28 : vector<1x256xf32>
    %30 = math.rsqrt %29 : vector<1x256xf32>
    %31 = arith.mulf %15, %30 : vector<1x256xf32>
    %32 = arith.mulf %23, %31 : vector<1x256xf32>
    %33 = arith.subf %16, %32 : vector<1x256xf32>
    %34 = vector.broadcast %31 : vector<1x256xf32> to vector<8x256xf32>
    %35 = arith.mulf %14, %34 : vector<8x256xf32>
    %36 = vector.broadcast %33 : vector<1x256xf32> to vector<8x256xf32>
    %37 = arith.addf %35, %36 : vector<8x256xf32>
    %cst_19 = arith.constant 0.000000e+00 : f32
    %38 = vector.broadcast %cst_19 : f32 to vector<8x256xf32>
    %39 = arith.cmpf ogt, %37, %38 : vector<8x256xf32>
    %cst_20 = arith.constant 2.000000e-01 : f32
    %40 = vector.broadcast %cst_20 : f32 to vector<8x256xf32>
    %41 = arith.mulf %40, %37 : vector<8x256xf32>
    %42 = arith.select %39, %37, %41 : vector<8x256xi1>, vector<8x256xf32>
    %43 = arith.truncf %42 : vector<8x256xf32> to vector<8x256xbf16>
    %c0_21 = arith.constant 0 : index
    %c0_22 = arith.constant 0 : index
    %44 = vector.load %arg6[%c0_21, %c0_22] : memref<256x512xbf16, #tpu.memory_space<vmem>>, vector<256x512xbf16>
    %cst_23 = arith.constant dense<0.000000e+00> : vector<8x512xf32>
    %45 = tpu.matmul %43, %44, %cst_23 {dimension_numbers = #tpu.dot_dimension_numbers<[1], [0], [0], [1], [0, 0, 1, 1], [], []>} : vector<8x256xbf16>, vector<256x512xbf16>, vector<8x512xf32> -> vector<8x512xf32>
    %c0_24 = arith.constant 0 : index
    %c0_25 = arith.constant 0 : index
    %46 = vector.load %arg7[%c0_24, %c0_25] : memref<1x512xf32, #tpu.memory_space<vmem>>, vector<1x512xf32>
    %c0_26 = arith.constant 0 : index
    %c0_27 = arith.constant 0 : index
    %47 = vector.load %arg8[%c0_26, %c0_27] : memref<1x512xf32, #tpu.memory_space<vmem>>, vector<1x512xf32>
    %cst_28 = arith.constant dense<0.000000e+00> : vector<512xf32>
    %48 = vector.multi_reduction <add>, %45, %cst_28 [0] : vector<8x512xf32> to vector<512xf32>
    %49 = vector.shape_cast %48 : vector<512xf32> to vector<1x512xf32>
    %50 = arith.mulf %45, %45 : vector<8x512xf32>
    %cst_29 = arith.constant dense<0.000000e+00> : vector<512xf32>
    %51 = vector.multi_reduction <add>, %50, %cst_29 [0] : vector<8x512xf32> to vector<512xf32>
    %52 = vector.shape_cast %51 : vector<512xf32> to vector<1x512xf32>
    %cst_30 = arith.constant 1.250000e-01 : f32
    %53 = vector.broadcast %cst_30 : f32 to vector<1x512xf32>
    %54 = arith.mulf %49, %53 : vector<1x512xf32>
    %cst_31 = arith.constant 1.250000e-01 : f32
    %55 = vector.broadcast %cst_31 : f32 to vector<1x512xf32>
    %56 = arith.mulf %52, %55 : vector<1x512xf32>
    %57 = arith.mulf %54, %54 : vector<1x512xf32>
    %58 = arith.subf %56, %57 : vector<1x512xf32>
    %cst_32 = arith.constant 8.000000e-01 : f32
    %59 = vector.broadcast %cst_32 : f32 to vector<1x512xf32>
    %60 = arith.addf %58, %59 : vector<1x512xf32>
    %61 = math.rsqrt %60 : vector<1x512xf32>
    %62 = arith.mulf %46, %61 : vector<1x512xf32>
    %63 = arith.mulf %54, %62 : vector<1x512xf32>
    %64 = arith.subf %47, %63 : vector<1x512xf32>
    %65 = vector.broadcast %62 : vector<1x512xf32> to vector<8x512xf32>
    %66 = arith.mulf %45, %65 : vector<8x512xf32>
    %67 = vector.broadcast %64 : vector<1x512xf32> to vector<8x512xf32>
    %68 = arith.addf %66, %67 : vector<8x512xf32>
    %cst_33 = arith.constant 0.000000e+00 : f32
    %69 = vector.broadcast %cst_33 : f32 to vector<8x512xf32>
    %70 = arith.cmpf ogt, %68, %69 : vector<8x512xf32>
    %cst_34 = arith.constant 2.000000e-01 : f32
    %71 = vector.broadcast %cst_34 : f32 to vector<8x512xf32>
    %72 = arith.mulf %71, %68 : vector<8x512xf32>
    %73 = arith.select %70, %68, %72 : vector<8x512xi1>, vector<8x512xf32>
    %74 = arith.truncf %73 : vector<8x512xf32> to vector<8x512xbf16>
    %c0_35 = arith.constant 0 : index
    %c0_36 = arith.constant 0 : index
    %75 = vector.load %arg9[%c0_35, %c0_36] : memref<512x1024xbf16, #tpu.memory_space<vmem>>, vector<512x1024xbf16>
    %cst_37 = arith.constant dense<0.000000e+00> : vector<8x1024xf32>
    %76 = tpu.matmul %74, %75, %cst_37 {dimension_numbers = #tpu.dot_dimension_numbers<[1], [0], [0], [1], [0, 0, 1, 1], [], []>} : vector<8x512xbf16>, vector<512x1024xbf16>, vector<8x1024xf32> -> vector<8x1024xf32>
    %c0_38 = arith.constant 0 : index
    %c0_39 = arith.constant 0 : index
    %77 = vector.load %arg10[%c0_38, %c0_39] : memref<1x1024xf32, #tpu.memory_space<vmem>>, vector<1x1024xf32>
    %c0_40 = arith.constant 0 : index
    %c0_41 = arith.constant 0 : index
    %78 = vector.load %arg11[%c0_40, %c0_41] : memref<1x1024xf32, #tpu.memory_space<vmem>>, vector<1x1024xf32>
    %cst_42 = arith.constant dense<0.000000e+00> : vector<1024xf32>
    %79 = vector.multi_reduction <add>, %76, %cst_42 [0] : vector<8x1024xf32> to vector<1024xf32>
    %80 = vector.shape_cast %79 : vector<1024xf32> to vector<1x1024xf32>
    %81 = arith.mulf %76, %76 : vector<8x1024xf32>
    %cst_43 = arith.constant dense<0.000000e+00> : vector<1024xf32>
    %82 = vector.multi_reduction <add>, %81, %cst_43 [0] : vector<8x1024xf32> to vector<1024xf32>
    %83 = vector.shape_cast %82 : vector<1024xf32> to vector<1x1024xf32>
    %cst_44 = arith.constant 1.250000e-01 : f32
    %84 = vector.broadcast %cst_44 : f32 to vector<1x1024xf32>
    %85 = arith.mulf %80, %84 : vector<1x1024xf32>
    %cst_45 = arith.constant 1.250000e-01 : f32
    %86 = vector.broadcast %cst_45 : f32 to vector<1x1024xf32>
    %87 = arith.mulf %83, %86 : vector<1x1024xf32>
    %88 = arith.mulf %85, %85 : vector<1x1024xf32>
    %89 = arith.subf %87, %88 : vector<1x1024xf32>
    %cst_46 = arith.constant 8.000000e-01 : f32
    %90 = vector.broadcast %cst_46 : f32 to vector<1x1024xf32>
    %91 = arith.addf %89, %90 : vector<1x1024xf32>
    %92 = math.rsqrt %91 : vector<1x1024xf32>
    %93 = arith.mulf %77, %92 : vector<1x1024xf32>
    %94 = arith.mulf %85, %93 : vector<1x1024xf32>
    %95 = arith.subf %78, %94 : vector<1x1024xf32>
    %96 = vector.broadcast %93 : vector<1x1024xf32> to vector<8x1024xf32>
    %97 = arith.mulf %76, %96 : vector<8x1024xf32>
    %98 = vector.broadcast %95 : vector<1x1024xf32> to vector<8x1024xf32>
    %99 = arith.addf %97, %98 : vector<8x1024xf32>
    %cst_47 = arith.constant 0.000000e+00 : f32
    %100 = vector.broadcast %cst_47 : f32 to vector<8x1024xf32>
    %101 = arith.cmpf ogt, %99, %100 : vector<8x1024xf32>
    %cst_48 = arith.constant 2.000000e-01 : f32
    %102 = vector.broadcast %cst_48 : f32 to vector<8x1024xf32>
    %103 = arith.mulf %102, %99 : vector<8x1024xf32>
    %104 = arith.select %101, %99, %103 : vector<8x1024xi1>, vector<8x1024xf32>
    %105 = arith.truncf %104 : vector<8x1024xf32> to vector<8x1024xbf16>
    %c0_49 = arith.constant 0 : index
    %c0_50 = arith.constant 0 : index
    %106 = vector.load %arg12[%c0_49, %c0_50] : memref<8x1024xbf16, #tpu.memory_space<vmem>>, vector<8x1024xbf16>
    tpu.vector_store %arg12[%c0_49, %c0_50], %105 {strides = array<i32>} : memref<8x1024xbf16, #tpu.memory_space<vmem>>, vector<8x1024xbf16>,
    return
  }
}

</mosaic_0001>

<llo_original>
// kernel: tpu_custom_call.1
$region0: #{tpu_custom_call.1}
  #allocation0 [shape = 'u32[]', space=smem, size = 0x4, offset = 0x4, fixed_abs, tag = 'smem constant byte address 0x4 - core index']
  #allocation1 [shape = 'u32[144,128]{1,0:T(1,128)}', space=vmem, size = 0x12000, scoped, tag = 'internal scratch']
  %s0 = inlined_call_operand.hbm [shape: f32[8,8], index: 0, kind: input, shape index: {}]
  %s1 = inlined_call_operand.hbm [shape: bf16[8,128], index: 1, kind: input, shape index: {}]
  %s2 = inlined_call_operand.hbm [shape: f32[1,128], index: 2, kind: input, shape index: {}]
  %s3 = inlined_call_operand.hbm [shape: bf16[128,256], index: 3, kind: input, shape index: {}]
  %s4 = inlined_call_operand.vmem [shape: f32[1,256], index: 4, kind: input, shape index: {}]
  %s5 = inlined_call_operand.hbm [shape: f32[1,256], index: 5, kind: input, shape index: {}]
  %s6 = inlined_call_operand.hbm [shape: bf16[256,512], index: 6, kind: input, shape index: {}]
  %s7 = inlined_call_operand.vmem [shape: f32[1,512], index: 7, kind: input, shape index: {}]
  %s8 = inlined_call_operand.vmem [shape: f32[1,512], index: 8, kind: input, shape index: {}]
  %s9 = inlined_call_operand.hbm [shape: bf16[512,1024], index: 9, kind: input, shape index: {}]
  %s10 = inlined_call_operand.vmem [shape: f32[1,1024], index: 10, kind: input, shape index: {}]
  %s11 = inlined_call_operand.vmem [shape: f32[1,1024], index: 11, kind: input, shape index: {}]
  %s12 = inlined_call_operand.hbm [shape: bf16[8,1024], index: 12, kind: output, shape index: {}]
  %s13 = sld [smem:[#allocation0]]
  $region86: #{tpu_custom_call.1} parent=0
    _
  %s15 = ssub.s32 1, %s13
  %s16 = scalar_select 0, %s15, %s13
  $region1: #{tpu_custom_call.1} parent=0
    #allocation2 [shape = 'u8[4096]{0}', space=vmem, size = 0x1000, scoped, tag = 'input window, operand 0, single buffered']
    #allocation3 [shape = 's32[1]{0}', space=sflag, size = 0x4, scoped, tag = 'scoped memory for tpu_custom_call.1']
    #allocation4 [shape = 's32[1]{0}', space=sflag, size = 0x4, scoped, tag = 'scoped memory for tpu_custom_call.1']
    #allocation5 [shape = 'u8[2048]{0}', space=vmem, size = 0x800, scoped, tag = 'input window, operand 1, single buffered']
    #allocation6 [shape = 's32[1]{0}', space=sflag, size = 0x4, scoped, tag = 'scoped memory for tpu_custom_call.1']
    #allocation7 [shape = 'u8[512]{0}', space=vmem, size = 0x400, scoped, tag = 'input window, operand 2, single buffered']
    #allocation8 [shape = 'u8[65536]{0}', space=vmem, size = 0x10000, scoped, tag = 'input window, operand 3, single buffered']
    #allocation9 [shape = 's32[1]{0}', space=sflag, size = 0x4, scoped, tag = 'scoped memory for tpu_custom_call.1']
    #allocation10 [shape = 'u8[1024]{0}', space=vmem, size = 0x400, scoped, tag = 'input window, operand 5, single buffered']
    #allocation11 [shape = 'u8[262144]{0}', space=vmem, size = 0x40000, scoped, tag = 'input window, operand 6, single buffered']
    #allocation12 [shape = 's32[1]{0}', space=sflag, size = 0x4, scoped, tag = 'scoped memory for tpu_custom_call.1']
    #allocation13 [shape = 'u8[1048576]{0}', space=vmem, size = 0x100000, scoped, tag = 'input window, operand 9, single buffered']
    #allocation14 [shape = 'u8[16384]{0}', space=vmem, size = 0x4000, scoped, tag = 'output window, operand 0, single buffered']
    %17 = vsyncpa [#allocation3], 0
    %18 = vsyncpa [#allocation6], 0
    %19 = vsyncpa [#allocation9], 0
    %20 = vsyncpa [#allocation12], 0
    %21 = vsyncpa [#allocation4], 0
    // Predicated region
    $region2: #{tpu_custom_call.1} parent=1 // pred_check
      _
    $region3: #{tpu_custom_call.1} parent=1 // pred_check_branch
      %23 = sbr.rel (0) target = $region5
    $region4: #{tpu_custom_call.1} parent=1 // pred_region
      %s25 = ssub.s32 128, 128
      %26 = vsyncadd [#allocation3], %s25
      %s28 = sshll.u32 [#allocation2], 4
      %s29 = int_to_ptr.vmem [resolvable:$true] %s28
      %31 = dma.hbm_to_vmem [thread:$0]  %s0, 128, %s29, [#allocation3]
    $region5: #{tpu_custom_call.1} parent=1 // pred_fallthru
      _
    // Predicated region
    $region6: #{tpu_custom_call.1} parent=1 // pred_check
      _
    $region7: #{tpu_custom_call.1} parent=1 // pred_check_branch
      %33 = sbr.rel (0) target = $region9
    $region8: #{tpu_custom_call.1} parent=1 // pred_region
      %s35 = ssub.s32 64, 64
      %36 = vsyncadd [#allocation6], %s35
      %s38 = sshll.u32 [#allocation5], 4
      %s39 = int_to_ptr.vmem [resolvable:$true] %s38
      %41 = dma.hbm_to_vmem [thread:$0]  %s1, 64, %s39, [#allocation6]
    $region9: #{tpu_custom_call.1} parent=1 // pred_fallthru
      _
    // Predicated region
    $region10: #{tpu_custom_call.1} parent=1 // pred_check
      _
    $region11: #{tpu_custom_call.1} parent=1 // pred_check_branch
      %43 = sbr.rel (0) target = $region13
    $region12: #{tpu_custom_call.1} parent=1 // pred_region
      %s45 = ssub.s32 16, 16
      %46 = vsyncadd [#allocation6], %s45
      %s48 = sshll.u32 [#allocation7], 4
      %s49 = int_to_ptr.vmem [resolvable:$true] %s48
      %51 = dma.hbm_to_vmem [thread:$0]  %s2, 16, %s49, [#allocation6]
    $region13: #{tpu_custom_call.1} parent=1 // pred_fallthru
      _
    // Predicated region
    $region14: #{tpu_custom_call.1} parent=1 // pred_check
      _
    $region15: #{tpu_custom_call.1} parent=1 // pred_check_branch
      %53 = sbr.rel (0) target = $region17
    $region16: #{tpu_custom_call.1} parent=1 // pred_region
      %s55 = ssub.s32 2048, 2048
      %56 = vsyncadd [#allocation9], %s55
      %s57 = sshll.u32 [#allocation8], 4
      %s58 = int_to_ptr.vmem [resolvable:$true] %s57
      %63 = dma.hbm_to_vmem [thread:$0]  %s3, 2048, %s58, [#allocation9], 128, 128, 8
    $region17: #{tpu_custom_call.1} parent=1 // pred_fallthru
      _
    // Predicated region
    $region18: #{tpu_custom_call.1} parent=1 // pred_check
      _
    $region19: #{tpu_custom_call.1} parent=1 // pred_check_branch
      %65 = sbr.rel (0) target = $region21
    $region20: #{tpu_custom_call.1} parent=1 // pred_region
      _
    $region21: #{tpu_custom_call.1} parent=1 // pred_fallthru
      _
    // Predicated region
    $region22: #{tpu_custom_call.1} parent=1 // pred_check
      _
    $region23: #{tpu_custom_call.1} parent=1 // pred_check_branch
      %67 = sbr.rel (0) target = $region25
    $region24: #{tpu_custom_call.1} parent=1 // pred_region
      %s69 = ssub.s32 32, 32
      %70 = vsyncadd [#allocation9], %s69
      %s72 = sshll.u32 [#allocation10], 4
      %s73 = int_to_ptr.vmem [resolvable:$true] %s72
      %75 = dma.hbm_to_vmem [thread:$0]  %s5, 32, %s73, [#allocation9]
    $region25: #{tpu_custom_call.1} parent=1 // pred_fallthru
      _
    // Predicated region
    $region26: #{tpu_custom_call.1} parent=1 // pred_check
      _
    $region27: #{tpu_custom_call.1} parent=1 // pred_check_branch
      %77 = sbr.rel (0) target = $region29
    $region28: #{tpu_custom_call.1} parent=1 // pred_region
      %s79 = ssub.s32 8192, 8192
      %80 = vsyncadd [#allocation12], %s79
      %s81 = sshll.u32 [#allocation11], 4
      %s82 = int_to_ptr.vmem [resolvable:$true] %s81
      %87 = dma.hbm_to_vmem [thread:$0]  %s6, 8192, %s82, [#allocation12], 256, 256, 16
    $region29: #{tpu_custom_call.1} parent=1 // pred_fallthru
      _
    // Predicated region
    $region30: #{tpu_custom_call.1} parent=1 // pred_check
      _
    $region31: #{tpu_custom_call.1} parent=1 // pred_check_branch
      %89 = sbr.rel (0) target = $region33
    $region32: #{tpu_custom_call.1} parent=1 // pred_region
      _
    $region33: #{tpu_custom_call.1} parent=1 // pred_fallthru
      _
    // Predicated region
    $region34: #{tpu_custom_call.1} parent=1 // pred_check
      _
    $region35: #{tpu_custom_call.1} parent=1 // pred_check_branch
      %91 = sbr.rel (0) target = $region37
    $region36: #{tpu_custom_call.1} parent=1 // pred_region
      _
    $region37: #{tpu_custom_call.1} parent=1 // pred_fallthru
      _
    // Predicated region
    $region38: #{tpu_custom_call.1} parent=1 // pred_check
      _
    $region39: #{tpu_custom_call.1} parent=1 // pred_check_branch
      %93 = sbr.rel (0) target = $region41
    $region40: #{tpu_custom_call.1} parent=1 // pred_region
      %s95 = ssub.s32 32768, 32768
      %96 = vsyncadd [#allocation12], %s95
      %s97 = sshll.u32 [#allocation13], 4
      %s98 = int_to_ptr.vmem [resolvable:$true] %s97
      %103 = dma.hbm_to_vmem [thread:$0]  %s9, 32768, %s98, [#allocation12], 512, 512, 32
    $region41: #{tpu_custom_call.1} parent=1 // pred_fallthru
      _
    // Predicated region
    $region42: #{tpu_custom_call.1} parent=1 // pred_check
      _
    $region43: #{tpu_custom_call.1} parent=1 // pred_check_branch
      %105 = sbr.rel (0) target = $region45
    $region44: #{tpu_custom_call.1} parent=1 // pred_region
      _
    $region45: #{tpu_custom_call.1} parent=1 // pred_fallthru
      _
    // Predicated region
    $region46: #{tpu_custom_call.1} parent=1 // pred_check
      _
    $region47: #{tpu_custom_call.1} parent=1 // pred_check_branch
      %107 = sbr.rel (0) target = $region49
    $region48: #{tpu_custom_call.1} parent=1 // pred_region
      _
    $region49: #{tpu_custom_call.1} parent=1 // pred_fallthru
      _
    // Predicated region
    $region50: #{tpu_custom_call.1} parent=1 // pred_check
      _
    $region51: #{tpu_custom_call.1} parent=1 // pred_check_branch
      %109 = sbr.rel (0) target = $region53
    $region52: #{tpu_custom_call.1} parent=1 // pred_region
      %110 = dma.done [#allocation3], 128
    $region53: #{tpu_custom_call.1} parent=1 // pred_fallthru
      _
    // Predicated region
    $region54: #{tpu_custom_call.1} parent=1 // pred_check
      _
    $region55: #{tpu_custom_call.1} parent=1 // pred_check_branch
      %112 = sbr.rel (0) target = $region57
    $region56: #{tpu_custom_call.1} parent=1 // pred_region
      %113 = dma.done [#allocation6], 64
    $region57: #{tpu_custom_call.1} parent=1 // pred_fallthru
      _
    // Predicated region
    $region58: #{tpu_custom_call.1} parent=1 // pred_check
      _
    $region59: #{tpu_custom_call.1} parent=1 // pred_check_branch
      %115 = sbr.rel (0) target = $region61
    $region60: #{tpu_custom_call.1} parent=1 // pred_region
      %116 = dma.done [#allocation6], 16
    $region61: #{tpu_custom_call.1} parent=1 // pred_fallthru
      _
    // Predicated region
    $region62: #{tpu_custom_call.1} parent=1 // pred_check
      _
    $region63: #{tpu_custom_call.1} parent=1 // pred_check_branch
      %118 = sbr.rel (0) target = $region65
    $region64: #{tpu_custom_call.1} parent=1 // pred_region
      %119 = dma.done [#allocation9], 2048
    $region65: #{tpu_custom_call.1} parent=1 // pred_fallthru
      _
    // Predicated region
    $region66: #{tpu_custom_call.1} parent=1 // pred_check
      _
    $region67: #{tpu_custom_call.1} parent=1 // pred_check_branch
      %121 = sbr.rel (0) target = $region69
    $region68: #{tpu_custom_call.1} parent=1 // pred_region
      %122 = dma.done [#allocation9], 32
    $region69: #{tpu_custom_call.1} parent=1 // pred_fallthru
      _
    // Predicated region
    $region70: #{tpu_custom_call.1} parent=1 // pred_check
      _
    $region71: #{tpu_custom_call.1} parent=1 // pred_check_branch
      %124 = sbr.rel (0) target = $region73
    $region72: #{tpu_custom_call.1} parent=1 // pred_region
      %125 = dma.done [#allocation12], 8192
    $region73: #{tpu_custom_call.1} parent=1 // pred_fallthru
      _
    // Predicated region
    $region74: #{tpu_custom_call.1} parent=1 // pred_check
      _
    $region75: #{tpu_custom_call.1} parent=1 // pred_check_branch
      %127 = sbr.rel (0) target = $region77
    $region76: #{tpu_custom_call.1} parent=1 // pred_region
      %128 = dma.done [#allocation12], 32768
    $region77: #{tpu_custom_call.1} parent=1 // pred_fallthru
      _
    %v130 = vld [vmem:[#allocation2] sm:$0xff]
    %v131 = vpack.c.bf16 %v130, %v130
    %v132 = vld [vmem:[#allocation5] sm:$0xf]
    %v133 = vld [vmem:[#allocation7] sm:$0x1]
    %v135 = vlaneseq
    %v136 = vshrl.u32 %v135, 7
    %v137 = vsub.s32 0, %v136
    %v138 = vrot.slane %v133, %v137
    %vm140 = vcmask 64512
    %v142 = vsel %vm140, %v131, 0
    %vm144 = vcmask 1043456
    %v146 = vsel %vm144, %v132, 0
    %148 = vmatprep.subr.bf16.mxu0 0
    %149 = vmatpush1.bf16.msra.mxu0 %v146
    %150 = vmatprep.subr.bf16.mxu0 0
    %151 = vmatpush1.bf16.msra.mxu0 0
    %152 = vmatprep.subr.bf16.mxu0 0
    %153 = vmatpush1.bf16.msra.mxu0 0
    %154 = vmatprep.subr.bf16.mxu0 0
    %155 = vmatpush1.bf16.msra.mxu0 0
    %156 = vmatprep.subr.bf16.mxu0 0
    %157 = vmatpush1.bf16.msra.mxu0 0
    %158 = vmatprep.subr.bf16.mxu0 0
    %159 = vmatpush1.bf16.msra.mxu0 0
    %160 = vmatprep.subr.bf16.mxu0 0
    %161 = vmatpush1.bf16.msra.mxu0 0
    %162 = vmatprep.subr.bf16.mxu0 0
    %163 = vmatpush1.bf16.msra.mxu0 0
    %164 = vmatprep.subr.bf16.mxu0 0
    %165 = vmatpush1.bf16.msra.mxu0 0
    %166 = vmatprep.subr.bf16.mxu0 0
    %167 = vmatpush1.bf16.msra.mxu0 0
    %168 = vmatprep.subr.bf16.mxu0 0
    %169 = vmatpush1.bf16.msra.mxu0 0
    %170 = vmatprep.subr.bf16.mxu0 0
    %171 = vmatpush1.bf16.msra.mxu0 0
    %172 = vmatprep.subr.bf16.mxu0 0
    %173 = vmatpush1.bf16.msra.mxu0 0
    %174 = vmatprep.subr.bf16.mxu0 0
    %175 = vmatpush1.bf16.msra.mxu0 0
    %176 = vmatprep.subr.bf16.mxu0 0
    %177 = vmatpush1.bf16.msra.mxu0 0
    %178 = vmatprep.subr.bf16.mxu0 0
    %179 = vmatpush1.bf16.msra.mxu0 0
    %180 = vmatprep.mubr.bf16.mxu0 0
    %181 = vmatmul.mubr.bf16.gmra.mrb[0].mxu0 %v142
    %v182 = vpop.f32.mrb[0].mxu0
    %v183 = vadd.f32 %v138, %v182
    %v184 = vpop.f32.mrb[0].mxu0
    %v185 = vpop.f32.mrb[0].mxu0
    %v186 = vpop.f32.mrb[0].mxu0
    %187 = vdwg.mxu0
    %vm188 = vcmp.gt.f32.partialorder %v183, 0.0
    %v189 = vmul.f32 %v183, 0.2
    %v190 = vsel %vm188, %v183, %v189
    %v191 = vpack.c.bf16 %v190, %v190
    %v192 = vld [vmem:[#allocation8] sm:$0xff]
    %v193 = vld [vmem:[#allocation8 + $0x8] sm:$0xff]
    %v194 = vld [vmem:[#allocation8 + $0x10] sm:$0xff]
    %v195 = vld [vmem:[#allocation8 + $0x18] sm:$0xff]
    %v196 = vld [vmem:[#allocation8 + $0x20] sm:$0xff]
    %v197 = vld [vmem:[#allocation8 + $0x28] sm:$0xff]
    %v198 = vld [vmem:[#allocation8 + $0x30] sm:$0xff]
    %v199 = vld [vmem:[#allocation8 + $0x38] sm:$0xff]
    %v200 = vld [vmem:[#allocation8 + $0x40] sm:$0xff]
    %v201 = vld [vmem:[#allocation8 + $0x48] sm:$0xff]
    %v202 = vld [vmem:[#allocation8 + $0x50] sm:$0xff]
    %v203 = vld [vmem:[#allocation8 + $0x58] sm:$0xff]
    %v204 = vld [vmem:[#allocation8 + $0x60] sm:$0xff]
    %v205 = vld [vmem:[#allocation8 + $0x68] sm:$0xff]
    %v206 = vld [vmem:[#allocation8 + $0x70] sm:$0xff]
    %v207 = vld [vmem:[#allocation8 + $0x78] sm:$0xff]
    %v224 = vunpack.c.l.b16 %v192
    %v225 = vunpack.c.h.b16 %v192
    %v226 = vunpack.c.l.b16 %v193
    %v227 = vunpack.c.h.b16 %v193
    %v228 = vunpack.c.l.b16 %v194
    %v229 = vunpack.c.h.b16 %v194
    %v230 = vunpack.c.l.b16 %v195
    %v231 = vunpack.c.h.b16 %v195
    %v232 = vunpack.c.l.b16 %v196
    %v233 = vunpack.c.h.b16 %v196
    %v234 = vunpack.c.l.b16 %v197
    %v235 = vunpack.c.h.b16 %v197
    %v236 = vunpack.c.l.b16 %v198
    %v237 = vunpack.c.h.b16 %v198
    %v238 = vunpack.c.l.b16 %v199
    %v239 = vunpack.c.h.b16 %v199
    %v240 = vunpack.c.l.b16 %v200
    %v241 = vunpack.c.h.b16 %v200
    %v242 = vunpack.c.l.b16 %v201
    %v243 = vunpack.c.h.b16 %v201
    %v244 = vunpack.c.l.b16 %v202
    %v245 = vunpack.c.h.b16 %v202
    %v246 = vunpack.c.l.b16 %v203
    %v247 = vunpack.c.h.b16 %v203
    %v248 = vunpack.c.l.b16 %v204
    %v249 = vunpack.c.h.b16 %v204
    %v250 = vunpack.c.l.b16 %v205
    %v251 = vunpack.c.h.b16 %v205
    %v252 = vunpack.c.l.b16 %v206
    %v253 = vunpack.c.h.b16 %v206
    %v254 = vunpack.c.l.b16 %v207
    %v255 = vunpack.c.h.b16 %v207
    %v256 = vpack.c.b16 %v226, %v224
    %v257 = vpack.c.b16 %v227, %v225
    %v258 = vpack.c.b16 %v230, %v228
    %v259 = vpack.c.b16 %v231, %v229
    %v260 = vpack.c.b16 %v234, %v232
    %v261 = vpack.c.b16 %v235, %v233
    %v262 = vpack.c.b16 %v238, %v236
    %v263 = vpack.c.b16 %v239, %v237
    %v264 = vpack.c.b16 %v242, %v240
    %v265 = vpack.c.b16 %v243, %v241
    %v266 = vpack.c.b16 %v246, %v244
    %v267 = vpack.c.b16 %v247, %v245
    %v268 = vpack.c.b16 %v250, %v248
    %v269 = vpack.c.b16 %v251, %v249
    %v270 = vpack.c.b16 %v254, %v252
    %v271 = vpack.c.b16 %v255, %v253
    %288 = vmatprep.subr.bf16.mxu0 %v257
    %289 = vmatpush1.bf16.msra.mxu0 %v256
    %290 = vmatprep.subr.bf16.mxu0 %v259
    %291 = vmatpush1.bf16.msra.mxu0 %v258
    %292 = vmatprep.subr.bf16.mxu0 %v261
    %293 = vmatpush1.bf16.msra.mxu0 %v260
    %294 = vmatprep.subr.bf16.mxu0 %v263
    %295 = vmatpush1.bf16.msra.mxu0 %v262
    %296 = vmatprep.subr.bf16.mxu0 %v265
    %297 = vmatpush1.bf16.msra.mxu0 %v264
    %298 = vmatprep.subr.bf16.mxu0 %v267
    %299 = vmatpush1.bf16.msra.mxu0 %v266
    %300 = vmatprep.subr.bf16.mxu0 %v269
    %301 = vmatpush1.bf16.msra.mxu0 %v268
    %302 = vmatprep.subr.bf16.mxu0 %v271
    %303 = vmatpush1.bf16.msra.mxu0 %v270
    %304 = vmatprep.subr.bf16.mxu0 0
    %305 = vmatpush1.bf16.msra.mxu0 0
    %306 = vmatprep.subr.bf16.mxu0 0
    %307 = vmatpush1.bf16.msra.mxu0 0
    %308 = vmatprep.subr.bf16.mxu0 0
    %309 = vmatpush1.bf16.msra.mxu0 0
    %310 = vmatprep.subr.bf16.mxu0 0
    %311 = vmatpush1.bf16.msra.mxu0 0
    %312 = vmatprep.subr.bf16.mxu0 0
    %313 = vmatpush1.bf16.msra.mxu0 0
    %314 = vmatprep.subr.bf16.mxu0 0
    %315 = vmatpush1.bf16.msra.mxu0 0
    %316 = vmatprep.subr.bf16.mxu0 0
    %317 = vmatpush1.bf16.msra.mxu0 0
    %318 = vmatprep.subr.bf16.mxu0 0
    %319 = vmatpush1.bf16.msra.mxu0 0
    %320 = vmatprep.mubr.bf16.mxu0 0
    %321 = vmatmul.mubr.bf16.gmra.mrb[0].mxu0 %v191
    %v322 = vpop.f32.mrb[0].mxu0
    %v323 = vadd.f32 0.0, %v322
    %v324 = vpop.f32.mrb[0].mxu0
    %v325 = vadd.f32 0.0, %v324
    %v326 = vpop.f32.mrb[0].mxu0
    %v327 = vpop.f32.mrb[0].mxu0
    %328 = vdwg.mxu0
    %v329 = vld [vmem:[%s4] sm:$0x3]
    %v330 = vld [vmem:[#allocation10] sm:$0x3]
    %v331 = vrot.slane %v323, 4
    %v332 = vadd.f32 %v323, %v331
    %v333 = vrot.slane %v332, 2
    %v334 = vadd.f32 %v332, %v333
    %v335 = vrot.slane %v334, 1
    %v336 = vadd.f32 %v334, %v335
    %v337 = vrot.slane %v325, 4
    %v338 = vadd.f32 %v325, %v337
    %v339 = vrot.slane %v338, 2
    %v340 = vadd.f32 %v338, %v339
    %v341 = vrot.slane %v340, 1
    %v342 = vadd.f32 %v340, %v341
    %v343 = vmul.f32 %v323, %v323
    %v344 = vmul.f32 %v325, %v325
    %v345 = vrot.slane %v343, 4
    %v346 = vadd.f32 %v343, %v345
    %v347 = vrot.slane %v346, 2
    %v348 = vadd.f32 %v346, %v347
    %v349 = vrot.slane %v348, 1
    %v350 = vadd.f32 %v348, %v349
    %v351 = vrot.slane %v344, 4
    %v352 = vadd.f32 %v344, %v351
    %v353 = vrot.slane %v352, 2
    %v354 = vadd.f32 %v352, %v353
    %v355 = vrot.slane %v354, 1
    %v356 = vadd.f32 %v354, %v355
    %v357 = vmul.f32 %v336, 0.125
    %v358 = vmul.f32 %v342, 0.125
    %v359 = vmul.f32 %v350, 0.125
    %v360 = vmul.f32 %v356, 0.125
    %v361 = vmul.f32 %v357, %v357
    %v362 = vmul.f32 %v358, %v358
    %v363 = vsub.f32 %v359, %v361
    %v364 = vsub.f32 %v360, %v362
    %v365 = vadd.f32 %v363, 0.8
    %v366 = vadd.f32 %v364, 0.8
    %v367 = vrsqrt.pop %v365
    %v368 = vrsqrt.pop %v366
    %v371 = vcombine.low %v367, %v368
    %v373 = vunpack.c.l.s4 1966171168
    %v374 = vunpack.c.0.s8 %v373
    %v375 = vlaneseq
    %v376 = vshrl.u32 %v375, 7
    %v377 = vsub.s32 %v374, %v376
    %v378 = vrot.slane %v371, %v377
    %v380 = vunpack.c.l.s4 1966171168
    %v381 = vunpack.c.0.s8 %v380
    %v382 = vlaneseq
    %v383 = vshrl.u32 %v382, 7
    %v384 = vsub.s32 %v381, %v383
    %v385 = vrot.slane %v378, %v384
    %v387 = vmul.f32 %v329, %v385
    %v389 = vlaneseq
    %v390 = vshrl.u32 %v389, 7
    %v391 = vsub.s32 0, %v390
    %v392 = vrot.slane %v387, %v391
    %v393 = vlaneseq
    %v394 = vshrl.u32 %v393, 7
    %v395 = vsub.s32 1, %v394
    %v396 = vrot.slane %v387, %v395
    %v399 = vmul.f32 %v357, %v392
    %v400 = vmul.f32 %v358, %v396
    %v403 = vcombine.low %v399, %v400
    %v405 = vunpack.c.l.s4 1966171168
    %v406 = vunpack.c.0.s8 %v405
    %v407 = vlaneseq
    %v408 = vshrl.u32 %v407, 7
    %v409 = vsub.s32 %v406, %v408
    %v410 = vrot.slane %v403, %v409
    %v412 = vunpack.c.l.s4 1966171168
    %v413 = vunpack.c.0.s8 %v412
    %v414 = vlaneseq
    %v415 = vshrl.u32 %v414, 7
    %v416 = vsub.s32 %v413, %v415
    %v417 = vrot.slane %v410, %v416
    %v419 = vsub.f32 %v330, %v417
    %v420 = vmul.f32 %v323, %v392
    %v421 = vmul.f32 %v325, %v396
    %v423 = vlaneseq
    %v424 = vshrl.u32 %v423, 7
    %v425 = vsub.s32 0, %v424
    %v426 = vrot.slane %v419, %v425
    %v427 = vlaneseq
    %v428 = vshrl.u32 %v427, 7
    %v429 = vsub.s32 1, %v428
    %v430 = vrot.slane %v419, %v429
    %v433 = vadd.f32 %v420, %v426
    %v434 = vadd.f32 %v421, %v430
    %vm435 = vcmp.gt.f32.partialorder %v433, 0.0
    %vm436 = vcmp.gt.f32.partialorder %v434, 0.0
    %v437 = vmul.f32 %v433, 0.2
    %v438 = vmul.f32 %v434, 0.2
    %v439 = vsel %vm435, %v433, %v437
    %v440 = vsel %vm436, %v434, %v438
    %v441 = vpack.c.bf16 %v439, %v439
    %v442 = vpack.c.bf16 %v440, %v440
    %v443 = vld [vmem:[#allocation11] sm:$0xff]
    %v444 = vld [vmem:[#allocation11 + $0x8] sm:$0xff]
    %v445 = vld [vmem:[#allocation11 + $0x10] sm:$0xff]
    %v446 = vld [vmem:[#allocation11 + $0x18] sm:$0xff]
    %v447 = vld [vmem:[#allocation11 + $0x20] sm:$0xff]
    %v448 = vld [vmem:[#allocation11 + $0x28] sm:$0xff]
    %v449 = vld [vmem:[#allocation11 + $0x30] sm:$0xff]
    %v450 = vld [vmem:[#allocation11 + $0x38] sm:$0xff]
    %v451 = vld [vmem:[#allocation11 + $0x40] sm:$0xff]
    %v452 = vld [vmem:[#allocation11 + $0x48] sm:$0xff]
    %v453 = vld [vmem:[#allocation11 + $0x50] sm:$0xff]
    %v454 = vld [vmem:[#allocation11 + $0x58] sm:$0xff]
    %v455 = vld [vmem:[#allocation11 + $0x60] sm:$0xff]
    %v456 = vld [vmem:[#allocation11 + $0x68] sm:$0xff]
    %v457 = vld [vmem:[#allocation11 + $0x70] sm:$0xff]
    %v458 = vld [vmem:[#allocation11 + $0x78] sm:$0xff]
    %v459 = vld [vmem:[#allocation11 + $0x80] sm:$0xff]
    %v460 = vld [vmem:[#allocation11 + $0x88] sm:$0xff]
    %v461 = vld [vmem:[#allocation11 + $0x90] sm:$0xff]
    %v462 = vld [vmem:[#allocation11 + $0x98] sm:$0xff]
    %v463 = vld [vmem:[#allocation11 + $0xa0] sm:$0xff]
    %v464 = vld [vmem:[#allocation11 + $0xa8] sm:$0xff]
    %v465 = vld [vmem:[#allocation11 + $0xb0] sm:$0xff]
    %v466 = vld [vmem:[#allocation11 + $0xb8] sm:$0xff]
    %v467 = vld [vmem:[#allocation11 + $0xc0] sm:$0xff]
    %v468 = vld [vmem:[#allocation11 + $0xc8] sm:$0xff]
    %v469 = vld [vmem:[#allocation11 + $0xd0] sm:$0xff]
    %v470 = vld [vmem:[#allocation11 + $0xd8] sm:$0xff]
    %v471 = vld [vmem:[#allocation11 + $0xe0] sm:$0xff]
    %v472 = vld [vmem:[#allocation11 + $0xe8] sm:$0xff]
    %v473 = vld [vmem:[#allocation11 + $0xf0] sm:$0xff]
    %v474 = vld [vmem:[#allocation11 + $0xf8] sm:$0xff]
    %v475 = vld [vmem:[#allocation11 + $0x100] sm:$0xff]
    %v476 = vld [vmem:[#allocation11 + $0x108] sm:$0xff]
    %v477 = vld [vmem:[#allocation11 + $0x110] sm:$0xff]
    %v478 = vld [vmem:[#allocation11 + $0x118] sm:$0xff]
    %v479 = vld [vmem:[#allocation11 + $0x120] sm:$0xff]
    %v480 = vld [vmem:[#allocation11 + $0x128] sm:$0xff]
    %v481 = vld [vmem:[#allocation11 + $0x130] sm:$0xff]
    %v482 = vld [vmem:[#allocation11 + $0x138] sm:$0xff]
    %v483 = vld [vmem:[#allocation11 + $0x140] sm:$0xff]
    %v484 = vld [vmem:[#allocation11 + $0x148] sm:$0xff]
    %v485 = vld [vmem:[#allocation11 + $0x150] sm:$0xff]
    %v486 = vld [vmem:[#allocation11 + $0x158] sm:$0xff]
    %v487 = vld [vmem:[#allocation11 + $0x160] sm:$0xff]
    %v488 = vld [vmem:[#allocation11 + $0x168] sm:$0xff]
    %v489 = vld [vmem:[#allocation11 + $0x170] sm:$0xff]
    %v490 = vld [vmem:[#allocation11 + $0x178] sm:$0xff]
    %v491 = vld [vmem:[#allocation11 + $0x180] sm:$0xff]
    %v492 = vld [vmem:[#allocation11 + $0x188] sm:$0xff]
    %v493 = vld [vmem:[#allocation11 + $0x190] sm:$0xff]
    %v494 = vld [vmem:[#allocation11 + $0x198] sm:$0xff]
    %v495 = vld [vmem:[#allocation11 + $0x1a0] sm:$0xff]
    %v496 = vld [vmem:[#allocation11 + $0x1a8] sm:$0xff]
    %v497 = vld [vmem:[#allocation11 + $0x1b0] sm:$0xff]
    %v498 = vld [vmem:[#allocation11 + $0x1b8] sm:$0xff]
    %v499 = vld [vmem:[#allocation11 + $0x1c0] sm:$0xff]
    %v500 = vld [vmem:[#allocation11 + $0x1c8] sm:$0xff]
    %v501 = vld [vmem:[#allocation11 + $0x1d0] sm:$0xff]
    %v502 = vld [vmem:[#allocation11 + $0x1d8] sm:$0xff]
    %v503 = vld [vmem:[#allocation11 + $0x1e0] sm:$0xff]
    %v504 = vld [vmem:[#allocation11 + $0x1e8] sm:$0xff]
    %v505 = vld [vmem:[#allocation11 + $0x1f0] sm:$0xff]
    %v506 = vld [vmem:[#allocation11 + $0x1f8] sm:$0xff]
    %v571 = vunpack.c.l.b16 %v443
    %v572 = vunpack.c.h.b16 %v443
    %v573 = vunpack.c.l.b16 %v444
    %v574 = vunpack.c.h.b16 %v444
    %v575 = vunpack.c.l.b16 %v445
    %v576 = vunpack.c.h.b16 %v445
    %v577 = vunpack.c.l.b16 %v446
    %v578 = vunpack.c.h.b16 %v446
    %v579 = vunpack.c.l.b16 %v447
    %v580 = vunpack.c.h.b16 %v447
    %v581 = vunpack.c.l.b16 %v448
    %v582 = vunpack.c.h.b16 %v448
    %v583 = vunpack.c.l.b16 %v449
    %v584 = vunpack.c.h.b16 %v449
    %v585 = vunpack.c.l.b16 %v450
    %v586 = vunpack.c.h.b16 %v450
    %v587 = vunpack.c.l.b16 %v451
    %v588 = vunpack.c.h.b16 %v451
    %v589 = vunpack.c.l.b16 %v452
    %v590 = vunpack.c.h.b16 %v452
    %v591 = vunpack.c.l.b16 %v453
    %v592 = vunpack.c.h.b16 %v453
    %v593 = vunpack.c.l.b16 %v454
    %v594 = vunpack.c.h.b16 %v454
    %v595 = vunpack.c.l.b16 %v455
    %v596 = vunpack.c.h.b16 %v455
    %v597 = vunpack.c.l.b16 %v456
    %v598 = vunpack.c.h.b16 %v456
    %v599 = vunpack.c.l.b16 %v457
    %v600 = vunpack.c.h.b16 %v457
    %v601 = vunpack.c.l.b16 %v458
    %v602 = vunpack.c.h.b16 %v458
    %v603 = vunpack.c.l.b16 %v459
    %v604 = vunpack.c.h.b16 %v459
    %v605 = vunpack.c.l.b16 %v460
    %v606 = vunpack.c.h.b16 %v460
    %v607 = vunpack.c.l.b16 %v461
    %v608 = vunpack.c.h.b16 %v461
    %v609 = vunpack.c.l.b16 %v462
    %v610 = vunpack.c.h.b16 %v462
    %v611 = vunpack.c.l.b16 %v463
    %v612 = vunpack.c.h.b16 %v463
    %v613 = vunpack.c.l.b16 %v464
    %v614 = vunpack.c.h.b16 %v464
    %v615 = vunpack.c.l.b16 %v465
    %v616 = vunpack.c.h.b16 %v465
    %v617 = vunpack.c.l.b16 %v466
    %v618 = vunpack.c.h.b16 %v466
    %v619 = vunpack.c.l.b16 %v467
    %v620 = vunpack.c.h.b16 %v467
    %v621 = vunpack.c.l.b16 %v468
    %v622 = vunpack.c.h.b16 %v468
    %v623 = vunpack.c.l.b16 %v469
    %v624 = vunpack.c.h.b16 %v469
    %v625 = vunpack.c.l.b16 %v470
    %v626 = vunpack.c.h.b16 %v470
    %v627 = vunpack.c.l.b16 %v471
    %v628 = vunpack.c.h.b16 %v471
    %v629 = vunpack.c.l.b16 %v472
    %v630 = vunpack.c.h.b16 %v472
    %v631 = vunpack.c.l.b16 %v473
    %v632 = vunpack.c.h.b16 %v473
    %v633 = vunpack.c.l.b16 %v474
    %v634 = vunpack.c.h.b16 %v474
    %v635 = vunpack.c.l.b16 %v475
    %v636 = vunpack.c.h.b16 %v475
    %v637 = vunpack.c.l.b16 %v476
    %v638 = vunpack.c.h.b16 %v476
    %v639 = vunpack.c.l.b16 %v477
    %v640 = vunpack.c.h.b16 %v477
    %v641 = vunpack.c.l.b16 %v478
    %v642 = vunpack.c.h.b16 %v478
    %v643 = vunpack.c.l.b16 %v479
    %v644 = vunpack.c.h.b16 %v479
    %v645 = vunpack.c.l.b16 %v480
    %v646 = vunpack.c.h.b16 %v480
    %v647 = vunpack.c.l.b16 %v481
    %v648 = vunpack.c.h.b16 %v481
    %v649 = vunpack.c.l.b16 %v482
    %v650 = vunpack.c.h.b16 %v482
    %v651 = vunpack.c.l.b16 %v483
    %v652 = vunpack.c.h.b16 %v483
    %v653 = vunpack.c.l.b16 %v484
    %v654 = vunpack.c.h.b16 %v484
    %v655 = vunpack.c.l.b16 %v485
    %v656 = vunpack.c.h.b16 %v485
    %v657 = vunpack.c.l.b16 %v486
    %v658 = vunpack.c.h.b16 %v486
    %v659 = vunpack.c.l.b16 %v487
    %v660 = vunpack.c.h.b16 %v487
    %v661 = vunpack.c.l.b16 %v488
    %v662 = vunpack.c.h.b16 %v488
    %v663 = vunpack.c.l.b16 %v489
    %v664 = vunpack.c.h.b16 %v489
    %v665 = vunpack.c.l.b16 %v490
    %v666 = vunpack.c.h.b16 %v490
    %v667 = vunpack.c.l.b16 %v491
    %v668 = vunpack.c.h.b16 %v491
    %v669 = vunpack.c.l.b16 %v492
    %v670 = vunpack.c.h.b16 %v492
    %v671 = vunpack.c.l.b16 %v493
    %v672 = vunpack.c.h.b16 %v493
    %v673 = vunpack.c.l.b16 %v494
    %v674 = vunpack.c.h.b16 %v494
    %v675 = vunpack.c.l.b16 %v495
    %v676 = vunpack.c.h.b16 %v495
    %v677 = vunpack.c.l.b16 %v496
    %v678 = vunpack.c.h.b16 %v496
    %v679 = vunpack.c.l.b16 %v497
    %v680 = vunpack.c.h.b16 %v497
    %v681 = vunpack.c.l.b16 %v498
    %v682 = vunpack.c.h.b16 %v498
    %v683 = vunpack.c.l.b16 %v499
    %v684 = vunpack.c.h.b16 %v499
    %v685 = vunpack.c.l.b16 %v500
    %v686 = vunpack.c.h.b16 %v500
    %v687 = vunpack.c.l.b16 %v501
    %v688 = vunpack.c.h.b16 %v501
    %v689 = vunpack.c.l.b16 %v502
    %v690 = vunpack.c.h.b16 %v502
    %v691 = vunpack.c.l.b16 %v503
    %v692 = vunpack.c.h.b16 %v503
    %v693 = vunpack.c.l.b16 %v504
    %v694 = vunpack.c.h.b16 %v504
    %v695 = vunpack.c.l.b16 %v505
    %v696 = vunpack.c.h.b16 %v505
    %v697 = vunpack.c.l.b16 %v506
    %v698 = vunpack.c.h.b16 %v506
    %v699 = vpack.c.b16 %v575, %v571
    %v700 = vpack.c.b16 %v576, %v572
    %v701 = vpack.c.b16 %v577, %v573
    %v702 = vpack.c.b16 %v578, %v574
    %v703 = vpack.c.b16 %v583, %v579
    %v704 = vpack.c.b16 %v584, %v580
    %v705 = vpack.c.b16 %v585, %v581
    %v706 = vpack.c.b16 %v586, %v582
    %v707 = vpack.c.b16 %v591, %v587
    %v708 = vpack.c.b16 %v592, %v588
    %v709 = vpack.c.b16 %v593, %v589
    %v710 = vpack.c.b16 %v594, %v590
    %v711 = vpack.c.b16 %v599, %v595
    %v712 = vpack.c.b16 %v600, %v596
    %v713 = vpack.c.b16 %v601, %v597
    %v714 = vpack.c.b16 %v602, %v598
    %v715 = vpack.c.b16 %v607, %v603
    %v716 = vpack.c.b16 %v608, %v604
    %v717 = vpack.c.b16 %v609, %v605
    %v718 = vpack.c.b16 %v610, %v606
    %v719 = vpack.c.b16 %v615, %v611
    %v720 = vpack.c.b16 %v616, %v612
    %v721 = vpack.c.b16 %v617, %v613
    %v722 = vpack.c.b16 %v618, %v614
    %v723 = vpack.c.b16 %v623, %v619
    %v724 = vpack.c.b16 %v624, %v620
    %v725 = vpack.c.b16 %v625, %v621
    %v726 = vpack.c.b16 %v626, %v622
    %v727 = vpack.c.b16 %v631, %v627
    %v728 = vpack.c.b16 %v632, %v628
    %v729 = vpack.c.b16 %v633, %v629
    %v730 = vpack.c.b16 %v634, %v630
    %v731 = vpack.c.b16 %v639, %v635
    %v732 = vpack.c.b16 %v640, %v636
    %v733 = vpack.c.b16 %v641, %v637
    %v734 = vpack.c.b16 %v642, %v638
    %v735 = vpack.c.b16 %v647, %v643
    %v736 = vpack.c.b16 %v648, %v644
    %v737 = vpack.c.b16 %v649, %v645
    %v738 = vpack.c.b16 %v650, %v646
    %v739 = vpack.c.b16 %v655, %v651
    %v740 = vpack.c.b16 %v656, %v652
    %v741 = vpack.c.b16 %v657, %v653
    %v742 = vpack.c.b16 %v658, %v654
    %v743 = vpack.c.b16 %v663, %v659
    %v744 = vpack.c.b16 %v664, %v660
    %v745 = vpack.c.b16 %v665, %v661
    %v746 = vpack.c.b16 %v666, %v662
    %v747 = vpack.c.b16 %v671, %v667
    %v748 = vpack.c.b16 %v672, %v668
    %v749 = vpack.c.b16 %v673, %v669
    %v750 = vpack.c.b16 %v674, %v670
    %v751 = vpack.c.b16 %v679, %v675
    %v752 = vpack.c.b16 %v680, %v676
    %v753 = vpack.c.b16 %v681, %v677
    %v754 = vpack.c.b16 %v682, %v678
    %v755 = vpack.c.b16 %v687, %v683
    %v756 = vpack.c.b16 %v688, %v684
    %v757 = vpack.c.b16 %v689, %v685
    %v758 = vpack.c.b16 %v690, %v686
    %v759 = vpack.c.b16 %v695, %v691
    %v760 = vpack.c.b16 %v696, %v692
    %v761 = vpack.c.b16 %v697, %v693
    %v762 = vpack.c.b16 %v698, %v694
    %827 = vmatprep.subr.bf16.mxu0 %v700
    %828 = vmatpush1.bf16.msra.mxu0 %v699
    %829 = vmatprep.subr.bf16.mxu0 %v704
    %830 = vmatpush1.bf16.msra.mxu0 %v703
    %831 = vmatprep.subr.bf16.mxu0 %v708
    %832 = vmatpush1.bf16.msra.mxu0 %v707
    %833 = vmatprep.subr.bf16.mxu0 %v712
    %834 = vmatpush1.bf16.msra.mxu0 %v711
    %835 = vmatprep.subr.bf16.mxu0 %v716
    %836 = vmatpush1.bf16.msra.mxu0 %v715
    %837 = vmatprep.subr.bf16.mxu0 %v720
    %838 = vmatpush1.bf16.msra.mxu0 %v719
    %839 = vmatprep.subr.bf16.mxu0 %v724
    %840 = vmatpush1.bf16.msra.mxu0 %v723
    %841 = vmatprep.subr.bf16.mxu0 %v728
    %842 = vmatpush1.bf16.msra.mxu0 %v727
    %843 = vmatprep.subr.bf16.mxu0 %v732
    %844 = vmatpush1.bf16.msra.mxu0 %v731
    %845 = vmatprep.subr.bf16.mxu0 %v736
    %846 = vmatpush1.bf16.msra.mxu0 %v735
    %847 = vmatprep.subr.bf16.mxu0 %v740
    %848 = vmatpush1.bf16.msra.mxu0 %v739
    %849 = vmatprep.subr.bf16.mxu0 %v744
    %850 = vmatpush1.bf16.msra.mxu0 %v743
    %851 = vmatprep.subr.bf16.mxu0 %v748
    %852 = vmatpush1.bf16.msra.mxu0 %v747
    %853 = vmatprep.subr.bf16.mxu0 %v752
    %854 = vmatpush1.bf16.msra.mxu0 %v751
    %855 = vmatprep.subr.bf16.mxu0 %v756
    %856 = vmatpush1.bf16.msra.mxu0 %v755
    %857 = vmatprep.subr.bf16.mxu0 %v760
    %858 = vmatpush1.bf16.msra.mxu0 %v759
    %859 = vmatprep.mubr.bf16.mxu0 %v442
    %860 = vmatmul.mubr.bf16.gmra.mrb[0].mxu0 %v441
    %v861 = vpop.f32.mrb[0].mxu0
    %v862 = vadd.f32 0.0, %v861
    %v863 = vpop.f32.mrb[0].mxu0
    %v864 = vadd.f32 0.0, %v863
    %v865 = vpop.f32.mrb[0].mxu0
    %v866 = vpop.f32.mrb[0].mxu0
    %867 = vdwg.mxu0
    %868 = vmatprep.subr.bf16.mxu0 %v702
    %869 = vmatpush1.bf16.msra.mxu0 %v701
    %870 = vmatprep.subr.bf16.mxu0 %v706
    %871 = vmatpush1.bf16.msra.mxu0 %v705
    %872 = vmatprep.subr.bf16.mxu0 %v710
    %873 = vmatpush1.bf16.msra.mxu0 %v709
    %874 = vmatprep.subr.bf16.mxu0 %v714
    %875 = vmatpush1.bf16.msra.mxu0 %v713
    %876 = vmatprep.subr.bf16.mxu0 %v718
    %877 = vmatpush1.bf16.msra.mxu0 %v717
    %878 = vmatprep.subr.bf16.mxu0 %v722
    %879 = vmatpush1.bf16.msra.mxu0 %v721
    %880 = vmatprep.subr.bf16.mxu0 %v726
    %881 = vmatpush1.bf16.msra.mxu0 %v725
    %882 = vmatprep.subr.bf16.mxu0 %v730
    %883 = vmatpush1.bf16.msra.mxu0 %v729
    %884 = vmatprep.subr.bf16.mxu0 %v734
    %885 = vmatpush1.bf16.msra.mxu0 %v733
    %886 = vmatprep.subr.bf16.mxu0 %v738
    %887 = vmatpush1.bf16.msra.mxu0 %v737
    %888 = vmatprep.subr.bf16.mxu0 %v742
    %889 = vmatpush1.bf16.msra.mxu0 %v741
    %890 = vmatprep.subr.bf16.mxu0 %v746
    %891 = vmatpush1.bf16.msra.mxu0 %v745
    %892 = vmatprep.subr.bf16.mxu0 %v750
    %893 = vmatpush1.bf16.msra.mxu0 %v749
    %894 = vmatprep.subr.bf16.mxu0 %v754
    %895 = vmatpush1.bf16.msra.mxu0 %v753
    %896 = vmatprep.subr.bf16.mxu0 %v758
    %897 = vmatpush1.bf16.msra.mxu0 %v757
    %898 = vmatprep.subr.bf16.mxu0 %v762
    %899 = vmatpush1.bf16.msra.mxu0 %v761
    %900 = vmatprep.mubr.bf16.mxu0 %v442
    %901 = vmatmul.mubr.bf16.gmra.mrb[0].mxu0 %v441
    %v902 = vpop.f32.mrb[0].mxu0
    %v903 = vadd.f32 0.0, %v902
    %v904 = vpop.f32.mrb[0].mxu0
    %v905 = vadd.f32 0.0, %v904
    %v906 = vpop.f32.mrb[0].mxu0
    %v907 = vpop.f32.mrb[0].mxu0
    %908 = vdwg.mxu0
    %v909 = vld [vmem:[%s7] sm:$0xf]
    %v910 = vld [vmem:[%s8] sm:$0xf]
    %v911 = vrot.slane %v862, 4
    %v912 = vadd.f32 %v862, %v911
    %v913 = vrot.slane %v912, 2
    %v914 = vadd.f32 %v912, %v913
    %v915 = vrot.slane %v914, 1
    %v916 = vadd.f32 %v914, %v915
    %v917 = vrot.slane %v864, 4
    %v918 = vadd.f32 %v864, %v917
    %v919 = vrot.slane %v918, 2
    %v920 = vadd.f32 %v918, %v919
    %v921 = vrot.slane %v920, 1
    %v922 = vadd.f32 %v920, %v921
    %v923 = vrot.slane %v903, 4
    %v924 = vadd.f32 %v903, %v923
    %v925 = vrot.slane %v924, 2
    %v926 = vadd.f32 %v924, %v925
    %v927 = vrot.slane %v926, 1
    %v928 = vadd.f32 %v926, %v927
    %v929 = vrot.slane %v905, 4
    %v930 = vadd.f32 %v905, %v929
    %v931 = vrot.slane %v930, 2
    %v932 = vadd.f32 %v930, %v931
    %v933 = vrot.slane %v932, 1
    %v934 = vadd.f32 %v932, %v933
    %v935 = vmul.f32 %v862, %v862
    %v936 = vmul.f32 %v864, %v864
    %v937 = vmul.f32 %v903, %v903
    %v938 = vmul.f32 %v905, %v905
    %v939 = vrot.slane %v935, 4
    %v940 = vadd.f32 %v935, %v939
    %v941 = vrot.slane %v940, 2
    %v942 = vadd.f32 %v940, %v941
    %v943 = vrot.slane %v942, 1
    %v944 = vadd.f32 %v942, %v943
    %v945 = vrot.slane %v936, 4
    %v946 = vadd.f32 %v936, %v945
    %v947 = vrot.slane %v946, 2
    %v948 = vadd.f32 %v946, %v947
    %v949 = vrot.slane %v948, 1
    %v950 = vadd.f32 %v948, %v949
    %v951 = vrot.slane %v937, 4
    %v952 = vadd.f32 %v937, %v951
    %v953 = vrot.slane %v952, 2
    %v954 = vadd.f32 %v952, %v953
    %v955 = vrot.slane %v954, 1
    %v956 = vadd.f32 %v954, %v955
    %v957 = vrot.slane %v938, 4
    %v958 = vadd.f32 %v938, %v957
    %v959 = vrot.slane %v958, 2
    %v960 = vadd.f32 %v958, %v959
    %v961 = vrot.slane %v960, 1
    %v962 = vadd.f32 %v960, %v961
    %v963 = vmul.f32 %v916, 0.125
    %v964 = vmul.f32 %v922, 0.125
    %v965 = vmul.f32 %v928, 0.125
    %v966 = vmul.f32 %v934, 0.125
    %v967 = vmul.f32 %v944, 0.125
    %v968 = vmul.f32 %v950, 0.125
    %v969 = vmul.f32 %v956, 0.125
    %v970 = vmul.f32 %v962, 0.125
    %v971 = vmul.f32 %v963, %v963
    %v972 = vmul.f32 %v964, %v964
    %v973 = vmul.f32 %v965, %v965
    %v974 = vmul.f32 %v966, %v966
    %v975 = vsub.f32 %v967, %v971
    %v976 = vsub.f32 %v968, %v972
    %v977 = vsub.f32 %v969, %v973
    %v978 = vsub.f32 %v970, %v974
    %v979 = vadd.f32 %v975, 0.8
    %v980 = vadd.f32 %v976, 0.8
    %v981 = vadd.f32 %v977, 0.8
    %v982 = vadd.f32 %v978, 0.8
    %v983 = vrsqrt.pop %v979
    %v984 = vrsqrt.pop %v980
    %v985 = vrsqrt.pop %v981
    %v986 = vrsqrt.pop %v982
    %v991 = vcombine.low %v983, %v984
    %v992 = vcombine.low %v985, %v986
    %v994 = vunpack.c.l.s4 1966171168
    %v995 = vunpack.c.0.s8 %v994
    %v996 = vlaneseq
    %v997 = vshrl.u32 %v996, 7
    %v998 = vsub.s32 %v995, %v997
    %v999 = vrot.slane %v991, %v998
    %v1001 = vunpack.c.l.s4 1966171168
    %v1002 = vunpack.c.0.s8 %v1001
    %v1003 = vlaneseq
    %v1004 = vshrl.u32 %v1003, 7
    %v1005 = vsub.s32 %v1002, %v1004
    %v1006 = vrot.slane %v992, %v1005
    %v1007 = vcombine.low %v999, %v1006
    %v1009 = vunpack.c.l.s4 1966171168
    %v1010 = vunpack.c.0.s8 %v1009
    %v1011 = vlaneseq
    %v1012 = vshrl.u32 %v1011, 7
    %v1013 = vsub.s32 %v1010, %v1012
    %v1014 = vrot.slane %v1007, %v1013
    %v1016 = vmul.f32 %v909, %v1014
    %v1018 = vlaneseq
    %v1019 = vshrl.u32 %v1018, 7
    %v1020 = vsub.s32 0, %v1019
    %v1021 = vrot.slane %v1016, %v1020
    %v1022 = vlaneseq
    %v1023 = vshrl.u32 %v1022, 7
    %v1024 = vsub.s32 1, %v1023
    %v1025 = vrot.slane %v1016, %v1024
    %v1026 = vlaneseq
    %v1027 = vshrl.u32 %v1026, 7
    %v1028 = vsub.s32 2, %v1027
    %v1029 = vrot.slane %v1016, %v1028
    %v1030 = vlaneseq
    %v1031 = vshrl.u32 %v1030, 7
    %v1032 = vsub.s32 3, %v1031
    %v1033 = vrot.slane %v1016, %v1032
    %v1038 = vmul.f32 %v963, %v1021
    %v1039 = vmul.f32 %v964, %v1025
    %v1040 = vmul.f32 %v965, %v1029
    %v1041 = vmul.f32 %v966, %v1033
    %v1046 = vcombine.low %v1038, %v1039
    %v1047 = vcombine.low %v1040, %v1041
    %v1049 = vunpack.c.l.s4 1966171168
    %v1050 = vunpack.c.0.s8 %v1049
    %v1051 = vlaneseq
    %v1052 = vshrl.u32 %v1051, 7
    %v1053 = vsub.s32 %v1050, %v1052
    %v1054 = vrot.slane %v1046, %v1053
    %v1056 = vunpack.c.l.s4 1966171168
    %v1057 = vunpack.c.0.s8 %v1056
    %v1058 = vlaneseq
    %v1059 = vshrl.u32 %v1058, 7
    %v1060 = vsub.s32 %v1057, %v1059
    %v1061 = vrot.slane %v1047, %v1060
    %v1062 = vcombine.low %v1054, %v1061
    %v1064 = vunpack.c.l.s4 1966171168
    %v1065 = vunpack.c.0.s8 %v1064
    %v1066 = vlaneseq
    %v1067 = vshrl.u32 %v1066, 7
    %v1068 = vsub.s32 %v1065, %v1067
    %v1069 = vrot.slane %v1062, %v1068
    %v1071 = vsub.f32 %v910, %v1069
    %v1072 = vmul.f32 %v862, %v1021
    %v1073 = vmul.f32 %v864, %v1025
    %v1074 = vmul.f32 %v903, %v1029
    %v1075 = vmul.f32 %v905, %v1033
    %v1077 = vlaneseq
    %v1078 = vshrl.u32 %v1077, 7
    %v1079 = vsub.s32 0, %v1078
    %v1080 = vrot.slane %v1071, %v1079
    %v1081 = vlaneseq
    %v1082 = vshrl.u32 %v1081, 7
    %v1083 = vsub.s32 1, %v1082
    %v1084 = vrot.slane %v1071, %v1083
    %v1085 = vlaneseq
    %v1086 = vshrl.u32 %v1085, 7
    %v1087 = vsub.s32 2, %v1086
    %v1088 = vrot.slane %v1071, %v1087
    %v1089 = vlaneseq
    %v1090 = vshrl.u32 %v1089, 7
    %v1091 = vsub.s32 3, %v1090
    %v1092 = vrot.slane %v1071, %v1091
    %v1097 = vadd.f32 %v1072, %v1080
    %v1098 = vadd.f32 %v1073, %v1084
    %v1099 = vadd.f32 %v1074, %v1088
    %v1100 = vadd.f32 %v1075, %v1092
    %vm1101 = vcmp.gt.f32.partialorder %v1097, 0.0
    %vm1102 = vcmp.gt.f32.partialorder %v1098, 0.0
    %vm1103 = vcmp.gt.f32.partialorder %v1099, 0.0
    %vm1104 = vcmp.gt.f32.partialorder %v1100, 0.0
    %v1105 = vmul.f32 %v1097, 0.2
    %v1106 = vmul.f32 %v1098, 0.2
    %v1107 = vmul.f32 %v1099, 0.2
    %v1108 = vmul.f32 %v1100, 0.2
    %v1109 = vsel %vm1101, %v1097, %v1105
    %v1110 = vsel %vm1102, %v1098, %v1106
    %v1111 = vsel %vm1103, %v1099, %v1107
    %v1112 = vsel %vm1104, %v1100, %v1108
    %v1113 = vpack.c.bf16 %v1109, %v1109
    %v1114 = vpack.c.bf16 %v1110, %v1110
    %v1115 = vpack.c.bf16 %v1111, %v1111
    %v1116 = vpack.c.bf16 %v1112, %v1112
    %v1117 = vld [vmem:[#allocation13] sm:$0xff]
    %v1118 = vld [vmem:[#allocation13 + $0x8] sm:$0xff]
    %v1119 = vld [vmem:[#allocation13 + $0x10] sm:$0xff]
    %v1120 = vld [vmem:[#allocation13 + $0x18] sm:$0xff]
    %v1121 = vld [vmem:[#allocation13 + $0x20] sm:$0xff]
    %v1122 = vld [vmem:[#allocation13 + $0x28] sm:$0xff]
    %v1123 = vld [vmem:[#allocation13 + $0x30] sm:$0xff]
    %v1124 = vld [vmem:[#allocation13 + $0x38] sm:$0xff]
    %v1125 = vld [vmem:[#allocation13 + $0x40] sm:$0xff]
    %v1126 = vld [vmem:[#allocation13 + $0x48] sm:$0xff]
    %v1127 = vld [vmem:[#allocation13 + $0x50] sm:$0xff]
    %v1128 = vld [vmem:[#allocation13 + $0x58] sm:$0xff]
    %v1129 = vld [vmem:[#allocation13 + $0x60] sm:$0xff]
    %v1130 = vld [vmem:[#allocation13 + $0x68] sm:$0xff]
    %v1131 = vld [vmem:[#allocation13 + $0x70] sm:$0xff]
    %v1132 = vld [vmem:[#allocation13 + $0x78] sm:$0xff]
    %v1133 = vld [vmem:[#allocation13 + $0x80] sm:$0xff]
    %v1134 = vld [vmem:[#allocation13 + $0x88] sm:$0xff]
    %v1135 = vld [vmem:[#allocation13 + $0x90] sm:$0xff]
    %v1136 = vld [vmem:[#allocation13 + $0x98] sm:$0xff]
    %v1137 = vld [vmem:[#allocation13 + $0xa0] sm:$0xff]
    %v1138 = vld [vmem:[#allocation13 + $0xa8] sm:$0xff]
    %v1139 = vld [vmem:[#allocation13 + $0xb0] sm:$0xff]
    %v1140 = vld [vmem:[#allocation13 + $0xb8] sm:$0xff]
    %v1141 = vld [vmem:[#allocation13 + $0xc0] sm:$0xff]
    %v1142 = vld [vmem:[#allocation13 + $0xc8] sm:$0xff]
    %v1143 = vld [vmem:[#allocation13 + $0xd0] sm:$0xff]
    %v1144 = vld [vmem:[#allocation13 + $0xd8] sm:$0xff]
    %v1145 = vld [vmem:[#allocation13 + $0xe0] sm:$0xff]
    %v1146 = vld [vmem:[#allocation13 + $0xe8] sm:$0xff]
    %v1147 = vld [vmem:[#allocation13 + $0xf0] sm:$0xff]
    %v1148 = vld [vmem:[#allocation13 + $0xf8] sm:$0xff]
    %v1149 = vld [vmem:[#allocation13 + $0x100] sm:$0xff]
    %v1150 = vld [vmem:[#allocation13 + $0x108] sm:$0xff]
    %v1151 = vld [vmem:[#allocation13 + $0x110] sm:$0xff]
    %v1152 = vld [vmem:[#allocation13 + $0x118] sm:$0xff]
    %v1153 = vld [vmem:[#allocation13 + $0x120] sm:$0xff]
    %v1154 = vld [vmem:[#allocation13 + $0x128] sm:$0xff]
    %v1155 = vld [vmem:[#allocation13 + $0x130] sm:$0xff]
    %v1156 = vld [vmem:[#allocation13 + $0x138] sm:$0xff]
    %v1157 = vld [vmem:[#allocation13 + $0x140] sm:$0xff]
    %v1158 = vld [vmem:[#allocation13 + $0x148] sm:$0xff]
    %v1159 = vld [vmem:[#allocation13 + $0x150] sm:$0xff]
    %v1160 = vld [vmem:[#allocation13 + $0x158] sm:$0xff]
    %v1161 = vld [vmem:[#allocation13 + $0x160] sm:$0xff]
    %v1162 = vld [vmem:[#allocation13 + $0x168] sm:$0xff]
    %v1163 = vld [vmem:[#allocation13 + $0x170] sm:$0xff]
    %v1164 = vld [vmem:[#allocation13 + $0x178] sm:$0xff]
    %v1165 = vld [vmem:[#allocation13 + $0x180] sm:$0xff]
    %v1166 = vld [vmem:[#allocation13 + $0x188] sm:$0xff]
    %v1167 = vld [vmem:[#allocation13 + $0x190] sm:$0xff]
    %v1168 = vld [vmem:[#allocation13 + $0x198] sm:$0xff]
    %v1169 = vld [vmem:[#allocation13 + $0x1a0] sm:$0xff]
    %v1170 = vld [vmem:[#allocation13 + $0x1a8] sm:$0xff]
    %v1171 = vld [vmem:[#allocation13 + $0x1b0] sm:$0xff]
    %v1172 = vld [vmem:[#allocation13 + $0x1b8] sm:$0xff]
    %v1173 = vld [vmem:[#allocation13 + $0x1c0] sm:$0xff]
    %v1174 = vld [vmem:[#allocation13 + $0x1c8] sm:$0xff]
    %v1175 = vld [vmem:[#allocation13 + $0x1d0] sm:$0xff]
    %v1176 = vld [vmem:[#allocation13 + $0x1d8] sm:$0xff]
    %v1177 = vld [vmem:[#allocation13 + $0x1e0] sm:$0xff]
    %v1178 = vld [vmem:[#allocation13 + $0x1e8] sm:$0xff]
    %v1179 = vld [vmem:[#allocation13 + $0x1f0] sm:$0xff]
    %v1180 = vld [vmem:[#allocation13 + $0x1f8] sm:$0xff]
    %v1181 = vld [vmem:[#allocation13 + $0x200] sm:$0xff]
    %v1182 = vld [vmem:[#allocation13 + $0x208] sm:$0xff]
    %v1183 = vld [vmem:[#allocation13 + $0x210] sm:$0xff]
    %v1184 = vld [vmem:[#allocation13 + $0x218] sm:$0xff]
    %v1185 = vld [vmem:[#allocation13 + $0x220] sm:$0xff]
    %v1186 = vld [vmem:[#allocation13 + $0x228] sm:$0xff]
    %v1187 = vld [vmem:[#allocation13 + $0x230] sm:$0xff]
    %v1188 = vld [vmem:[#allocation13 + $0x238] sm:$0xff]
    %v1189 = vld [vmem:[#allocation13 + $0x240] sm:$0xff]
    %v1190 = vld [vmem:[#allocation13 + $0x248] sm:$0xff]
    %v1191 = vld [vmem:[#allocation13 + $0x250] sm:$0xff]
    %v1192 = vld [vmem:[#allocation13 + $0x258] sm:$0xff]
    %v1193 = vld [vmem:[#allocation13 + $0x260] sm:$0xff]
    %v1194 = vld [vmem:[#allocation13 + $0x268] sm:$0xff]
    %v1195 = vld [vmem:[#allocation13 + $0x270] sm:$0xff]
    %v1196 = vld [vmem:[#allocation13 + $0x278] sm:$0xff]
    %v1197 = vld [vmem:[#allocation13 + $0x280] sm:$0xff]
    %v1198 = vld [vmem:[#allocation13 + $0x288] sm:$0xff]
    %v1199 = vld [vmem:[#allocation13 + $0x290] sm:$0xff]
    %v1200 = vld [vmem:[#allocation13 + $0x298] sm:$0xff]
    %v1201 = vld [vmem:[#allocation13 + $0x2a0] sm:$0xff]
    %v1202 = vld [vmem:[#allocation13 + $0x2a8] sm:$0xff]
    %v1203 = vld [vmem:[#allocation13 + $0x2b0] sm:$0xff]
    %v1204 = vld [vmem:[#allocation13 + $0x2b8] sm:$0xff]
    %v1205 = vld [vmem:[#allocation13 + $0x2c0] sm:$0xff]
    %v1206 = vld [vmem:[#allocation13 + $0x2c8] sm:$0xff]
    %v1207 = vld [vmem:[#allocation13 + $0x2d0] sm:$0xff]
    %v1208 = vld [vmem:[#allocation13 + $0x2d8] sm:$0xff]
    %v1209 = vld [vmem:[#allocation13 + $0x2e0] sm:$0xff]
    %v1210 = vld [vmem:[#allocation13 + $0x2e8] sm:$0xff]
    %v1211 = vld [vmem:[#allocation13 + $0x2f0] sm:$0xff]
    %v1212 = vld [vmem:[#allocation13 + $0x2f8] sm:$0xff]
    %v1213 = vld [vmem:[#allocation13 + $0x300] sm:$0xff]
    %v1214 = vld [vmem:[#allocation13 + $0x308] sm:$0xff]
    %v1215 = vld [vmem:[#allocation13 + $0x310] sm:$0xff]
    %v1216 = vld [vmem:[#allocation13 + $0x318] sm:$0xff]
    %v1217 = vld [vmem:[#allocation13 + $0x320] sm:$0xff]
    %v1218 = vld [vmem:[#allocation13 + $0x328] sm:$0xff]
    %v1219 = vld [vmem:[#allocation13 + $0x330] sm:$0xff]
    %v1220 = vld [vmem:[#allocation13 + $0x338] sm:$0xff]
    %v1221 = vld [vmem:[#allocation13 + $0x340] sm:$0xff]
    %v1222 = vld [vmem:[#allocation13 + $0x348] sm:$0xff]
    %v1223 = vld [vmem:[#allocation13 + $0x350] sm:$0xff]
    %v1224 = vld [vmem:[#allocation13 + $0x358] sm:$0xff]
    %v1225 = vld [vmem:[#allocation13 + $0x360] sm:$0xff]
    %v1226 = vld [vmem:[#allocation13 + $0x368] sm:$0xff]
    %v1227 = vld [vmem:[#allocation13 + $0x370] sm:$0xff]
    %v1228 = vld [vmem:[#allocation13 + $0x378] sm:$0xff]
    %v1229 = vld [vmem:[#allocation13 + $0x380] sm:$0xff]
    %v1230 = vld [vmem:[#allocation13 + $0x388] sm:$0xff]
    %v1231 = vld [vmem:[#allocation13 + $0x390] sm:$0xff]
    %v1232 = vld [vmem:[#allocation13 + $0x398] sm:$0xff]
    %v1233 = vld [vmem:[#allocation13 + $0x3a0] sm:$0xff]
    %v1234 = vld [vmem:[#allocation13 + $0x3a8] sm:$0xff]
    %v1235 = vld [vmem:[#allocation13 + $0x3b0] sm:$0xff]
    %v1236 = vld [vmem:[#allocation13 + $0x3b8] sm:$0xff]
    %v1237 = vld [vmem:[#allocation13 + $0x3c0] sm:$0xff]
    %v1238 = vld [vmem:[#allocation13 + $0x3c8] sm:$0xff]
    %v1239 = vld [vmem:[#allocation13 + $0x3d0] sm:$0xff]
    %v1240 = vld [vmem:[#allocation13 + $0x3d8] sm:$0xff]
    %v1241 = vld [vmem:[#allocation13 + $0x3e0] sm:$0xff]
    %v1242 = vld [vmem:[#allocation13 + $0x3e8] sm:$0xff]
    %v1243 = vld [vmem:[#allocation13 + $0x3f0] sm:$0xff]
    %v1244 = vld [vmem:[#allocation13 + $0x3f8] sm:$0xff]
    %v1245 = vld [vmem:[#allocation13 + $0x400] sm:$0xff]
    %v1246 = vld [vmem:[#allocation13 + $0x408] sm:$0xff]
    %v1247 = vld [vmem:[#allocation13 + $0x410] sm:$0xff]
    %v1248 = vld [vmem:[#allocation13 + $0x418] sm:$0xff]
    %v1249 = vld [vmem:[#allocation13 + $0x420] sm:$0xff]
    %v1250 = vld [vmem:[#allocation13 + $0x428] sm:$0xff]
    %v1251 = vld [vmem:[#allocation13 + $0x430] sm:$0xff]
    %v1252 = vld [vmem:[#allocation13 + $0x438] sm:$0xff]
    %v1253 = vld [vmem:[#allocation13 + $0x440] sm:$0xff]
    %v1254 = vld [vmem:[#allocation13 + $0x448] sm:$0xff]
    %v1255 = vld [vmem:[#allocation13 + $0x450] sm:$0xff]
    %v1256 = vld [vmem:[#allocation13 + $0x458] sm:$0xff]
    %v1257 = vld [vmem:[#allocation13 + $0x460] sm:$0xff]
    %v1258 = vld [vmem:[#allocation13 + $0x468] sm:$0xff]
    %v1259 = vld [vmem:[#allocation13 + $0x470] sm:$0xff]
    %v1260 = vld [vmem:[#allocation13 + $0x478] sm:$0xff]
    %v1261 = vld [vmem:[#allocation13 + $0x480] sm:$0xff]
    %v1262 = vld [vmem:[#allocation13 + $0x488] sm:$0xff]
    %v1263 = vld [vmem:[#allocation13 + $0x490] sm:$0xff]
    %v1264 = vld [vmem:[#allocation13 + $0x498] sm:$0xff]
    %v1265 = vld [vmem:[#allocation13 + $0x4a0] sm:$0xff]
    %v1266 = vld [vmem:[#allocation13 + $0x4a8] sm:$0xff]
    %v1267 = vld [vmem:[#allocation13 + $0x4b0] sm:$0xff]
    %v1268 = vld [vmem:[#allocation13 + $0x4b8] sm:$0xff]
    %v1269 = vld [vmem:[#allocation13 + $0x4c0] sm:$0xff]
    %v1270 = vld [vmem:[#allocation13 + $0x4c8] sm:$0xff]
    %v1271 = vld [vmem:[#allocation13 + $0x4d0] sm:$0xff]
    %v1272 = vld [vmem:[#allocation13 + $0x4d8] sm:$0xff]
    %v1273 = vld [vmem:[#allocation13 + $0x4e0] sm:$0xff]
    %v1274 = vld [vmem:[#allocation13 + $0x4e8] sm:$0xff]
    %v1275 = vld [vmem:[#allocation13 + $0x4f0] sm:$0xff]
    %v1276 = vld [vmem:[#allocation13 + $0x4f8] sm:$0xff]
    %v1277 = vld [vmem:[#allocation13 + $0x500] sm:$0xff]
    %v1278 = vld [vmem:[#allocation13 + $0x508] sm:$0xff]
    %v1279 = vld [vmem:[#allocation13 + $0x510] sm:$0xff]
    %v1280 = vld [vmem:[#allocation13 + $0x518] sm:$0xff]
    %v1281 = vld [vmem:[#allocation13 + $0x520] sm:$0xff]
    %v1282 = vld [vmem:[#allocation13 + $0x528] sm:$0xff]
    %v1283 = vld [vmem:[#allocation13 + $0x530] sm:$0xff]
    %v1284 = vld [vmem:[#allocation13 + $0x538] sm:$0xff]
    %v1285 = vld [vmem:[#allocation13 + $0x540] sm:$0xff]
    %v1286 = vld [vmem:[#allocation13 + $0x548] sm:$0xff]
    %v1287 = vld [vmem:[#allocation13 + $0x550] sm:$0xff]
    %v1288 = vld [vmem:[#allocation13 + $0x558] sm:$0xff]
    %v1289 = vld [vmem:[#allocation13 + $0x560] sm:$0xff]
    %v1290 = vld [vmem:[#allocation13 + $0x568] sm:$0xff]
    %v1291 = vld [vmem:[#allocation13 + $0x570] sm:$0xff]
    %v1292 = vld [vmem:[#allocation13 + $0x578] sm:$0xff]
    %v1293 = vld [vmem:[#allocation13 + $0x580] sm:$0xff]
    %v1294 = vld [vmem:[#allocation13 + $0x588] sm:$0xff]
    %v1295 = vld [vmem:[#allocation13 + $0x590] sm:$0xff]
    %v1296 = vld [vmem:[#allocation13 + $0x598] sm:$0xff]
    %v1297 = vld [vmem:[#allocation13 + $0x5a0] sm:$0xff]
    %v1298 = vld [vmem:[#allocation13 + $0x5a8] sm:$0xff]
    %v1299 = vld [vmem:[#allocation13 + $0x5b0] sm:$0xff]
    %v1300 = vld [vmem:[#allocation13 + $0x5b8] sm:$0xff]
    %v1301 = vld [vmem:[#allocation13 + $0x5c0] sm:$0xff]
    %v1302 = vld [vmem:[#allocation13 + $0x5c8] sm:$0xff]
    %v1303 = vld [vmem:[#allocation13 + $0x5d0] sm:$0xff]
    %v1304 = vld [vmem:[#allocation13 + $0x5d8] sm:$0xff]
    %v1305 = vld [vmem:[#allocation13 + $0x5e0] sm:$0xff]
    %v1306 = vld [vmem:[#allocation13 + $0x5e8] sm:$0xff]
    %v1307 = vld [vmem:[#allocation13 + $0x5f0] sm:$0xff]
    %v1308 = vld [vmem:[#allocation13 + $0x5f8] sm:$0xff]
    %v1309 = vld [vmem:[#allocation13 + $0x600] sm:$0xff]
    %v1310 = vld [vmem:[#allocation13 + $0x608] sm:$0xff]
    %v1311 = vld [vmem:[#allocation13 + $0x610] sm:$0xff]
    %v1312 = vld [vmem:[#allocation13 + $0x618] sm:$0xff]
    %v1313 = vld [vmem:[#allocation13 + $0x620] sm:$0xff]
    %v1314 = vld [vmem:[#allocation13 + $0x628] sm:$0xff]
    %v1315 = vld [vmem:[#allocation13 + $0x630] sm:$0xff]
    %v1316 = vld [vmem:[#allocation13 + $0x638] sm:$0xff]
    %v1317 = vld [vmem:[#allocation13 + $0x640] sm:$0xff]
    %v1318 = vld [vmem:[#allocation13 + $0x648] sm:$0xff]
    %v1319 = vld [vmem:[#allocation13 + $0x650] sm:$0xff]
    %v1320 = vld [vmem:[#allocation13 + $0x658] sm:$0xff]
    %v1321 = vld [vmem:[#allocation13 + $0x660] sm:$0xff]
    %v1322 = vld [vmem:[#allocation13 + $0x668] sm:$0xff]
    %v1323 = vld [vmem:[#allocation13 + $0x670] sm:$0xff]
    %v1324 = vld [vmem:[#allocation13 + $0x678] sm:$0xff]
    %v1325 = vld [vmem:[#allocation13 + $0x680] sm:$0xff]
    %v1326 = vld [vmem:[#allocation13 + $0x688] sm:$0xff]
    %v1327 = vld [vmem:[#allocation13 + $0x690] sm:$0xff]
    %v1328 = vld [vmem:[#allocation13 + $0x698] sm:$0xff]
    %v1329 = vld [vmem:[#allocation13 + $0x6a0] sm:$0xff]
    %v1330 = vld [vmem:[#allocation13 + $0x6a8] sm:$0xff]
    %v1331 = vld [vmem:[#allocation13 + $0x6b0] sm:$0xff]
    %v1332 = vld [vmem:[#allocation13 + $0x6b8] sm:$0xff]
    %v1333 = vld [vmem:[#allocation13 + $0x6c0] sm:$0xff]
    %v1334 = vld [vmem:[#allocation13 + $0x6c8] sm:$0xff]
    %v1335 = vld [vmem:[#allocation13 + $0x6d0] sm:$0xff]
    %v1336 = vld [vmem:[#allocation13 + $0x6d8] sm:$0xff]
    %v1337 = vld [vmem:[#allocation13 + $0x6e0] sm:$0xff]
    %v1338 = vld [vmem:[#allocation13 + $0x6e8] sm:$0xff]
    %v1339 = vld [vmem:[#allocation13 + $0x6f0] sm:$0xff]
    %v1340 = vld [vmem:[#allocation13 + $0x6f8] sm:$0xff]
    %v1341 = vld [vmem:[#allocation13 + $0x700] sm:$0xff]
    %v1342 = vld [vmem:[#allocation13 + $0x708] sm:$0xff]
    %v1343 = vld [vmem:[#allocation13 + $0x710] sm:$0xff]
    %v1344 = vld [vmem:[#allocation13 + $0x718] sm:$0xff]
    %v1345 = vld [vmem:[#allocation13 + $0x720] sm:$0xff]
    %v1346 = vld [vmem:[#allocation13 + $0x728] sm:$0xff]
    %v1347 = vld [vmem:[#allocation13 + $0x730] sm:$0xff]
    %v1348 = vld [vmem:[#allocation13 + $0x738] sm:$0xff]
    %v1349 = vld [vmem:[#allocation13 + $0x740] sm:$0xff]
    %v1350 = vld [vmem:[#allocation13 + $0x748] sm:$0xff]
    %v1351 = vld [vmem:[#allocation13 + $0x750] sm:$0xff]
    %v1352 = vld [vmem:[#allocation13 + $0x758] sm:$0xff]
    %v1353 = vld [vmem:[#allocation13 + $0x760] sm:$0xff]
    %v1354 = vld [vmem:[#allocation13 + $0x768] sm:$0xff]
    %v1355 = vld [vmem:[#allocation13 + $0x770] sm:$0xff]
    %v1356 = vld [vmem:[#allocation13 + $0x778] sm:$0xff]
    %v1357 = vld [vmem:[#allocation13 + $0x780] sm:$0xff]
    %v1358 = vld [vmem:[#allocation13 + $0x788] sm:$0xff]
    %v1359 = vld [vmem:[#allocation13 + $0x790] sm:$0xff]
    %v1360 = vld [vmem:[#allocation13 + $0x798] sm:$0xff]
    %v1361 = vld [vmem:[#allocation13 + $0x7a0] sm:$0xff]
    %v1362 = vld [vmem:[#allocation13 + $0x7a8] sm:$0xff]
    %v1363 = vld [vmem:[#allocation13 + $0x7b0] sm:$0xff]
    %v1364 = vld [vmem:[#allocation13 + $0x7b8] sm:$0xff]
    %v1365 = vld [vmem:[#allocation13 + $0x7c0] sm:$0xff]
    %v1366 = vld [vmem:[#allocation13 + $0x7c8] sm:$0xff]
    %v1367 = vld [vmem:[#allocation13 + $0x7d0] sm:$0xff]
    %v1368 = vld [vmem:[#allocation13 + $0x7d8] sm:$0xff]
    %v1369 = vld [vmem:[#allocation13 + $0x7e0] sm:$0xff]
    %v1370 = vld [vmem:[#allocation13 + $0x7e8] sm:$0xff]
    %v1371 = vld [vmem:[#allocation13 + $0x7f0] sm:$0xff]
    %v1372 = vld [vmem:[#allocation13 + $0x7f8] sm:$0xff]
    %v1629 = vunpack.c.l.b16 %v1117
    %v1630 = vunpack.c.h.b16 %v1117
    %v1631 = vunpack.c.l.b16 %v1118
    %v1632 = vunpack.c.h.b16 %v1118
    %v1633 = vunpack.c.l.b16 %v1119
    %v1634 = vunpack.c.h.b16 %v1119
    %v1635 = vunpack.c.l.b16 %v1120
    %v1636 = vunpack.c.h.b16 %v1120
    %v1637 = vunpack.c.l.b16 %v1121
    %v1638 = vunpack.c.h.b16 %v1121
    %v1639 = vunpack.c.l.b16 %v1122
    %v1640 = vunpack.c.h.b16 %v1122
    %v1641 = vunpack.c.l.b16 %v1123
    %v1642 = vunpack.c.h.b16 %v1123
    %v1643 = vunpack.c.l.b16 %v1124
    %v1644 = vunpack.c.h.b16 %v1124
    %v1645 = vunpack.c.l.b16 %v1125
    %v1646 = vunpack.c.h.b16 %v1125
    %v1647 = vunpack.c.l.b16 %v1126
    %v1648 = vunpack.c.h.b16 %v1126
    %v1649 = vunpack.c.l.b16 %v1127
    %v1650 = vunpack.c.h.b16 %v1127
    %v1651 = vunpack.c.l.b16 %v1128
    %v1652 = vunpack.c.h.b16 %v1128
    %v1653 = vunpack.c.l.b16 %v1129
    %v1654 = vunpack.c.h.b16 %v1129
    %v1655 = vunpack.c.l.b16 %v1130
    %v1656 = vunpack.c.h.b16 %v1130
    %v1657 = vunpack.c.l.b16 %v1131
    %v1658 = vunpack.c.h.b16 %v1131
    %v1659 = vunpack.c.l.b16 %v1132
    %v1660 = vunpack.c.h.b16 %v1132
    %v1661 = vunpack.c.l.b16 %v1133
    %v1662 = vunpack.c.h.b16 %v1133
    %v1663 = vunpack.c.l.b16 %v1134
    %v1664 = vunpack.c.h.b16 %v1134
    %v1665 = vunpack.c.l.b16 %v1135
    %v1666 = vunpack.c.h.b16 %v1135
    %v1667 = vunpack.c.l.b16 %v1136
    %v1668 = vunpack.c.h.b16 %v1136
    %v1669 = vunpack.c.l.b16 %v1137
    %v1670 = vunpack.c.h.b16 %v1137
    %v1671 = vunpack.c.l.b16 %v1138
    %v1672 = vunpack.c.h.b16 %v1138
    %v1673 = vunpack.c.l.b16 %v1139
    %v1674 = vunpack.c.h.b16 %v1139
    %v1675 = vunpack.c.l.b16 %v1140
    %v1676 = vunpack.c.h.b16 %v1140
    %v1677 = vunpack.c.l.b16 %v1141
    %v1678 = vunpack.c.h.b16 %v1141
    %v1679 = vunpack.c.l.b16 %v1142
    %v1680 = vunpack.c.h.b16 %v1142
    %v1681 = vunpack.c.l.b16 %v1143
    %v1682 = vunpack.c.h.b16 %v1143
    %v1683 = vunpack.c.l.b16 %v1144
    %v1684 = vunpack.c.h.b16 %v1144
    %v1685 = vunpack.c.l.b16 %v1145
    %v1686 = vunpack.c.h.b16 %v1145
    %v1687 = vunpack.c.l.b16 %v1146
    %v1688 = vunpack.c.h.b16 %v1146
    %v1689 = vunpack.c.l.b16 %v1147
    %v1690 = vunpack.c.h.b16 %v1147
    %v1691 = vunpack.c.l.b16 %v1148
    %v1692 = vunpack.c.h.b16 %v1148
    %v1693 = vunpack.c.l.b16 %v1149
    %v1694 = vunpack.c.h.b16 %v1149
    %v1695 = vunpack.c.l.b16 %v1150
    %v1696 = vunpack.c.h.b16 %v1150
    %v1697 = vunpack.c.l.b16 %v1151
    %v1698 = vunpack.c.h.b16 %v1151
    %v1699 = vunpack.c.l.b16 %v1152
    %v1700 = vunpack.c.h.b16 %v1152
    %v1701 = vunpack.c.l.b16 %v1153
    %v1702 = vunpack.c.h.b16 %v1153
    %v1703 = vunpack.c.l.b16 %v1154
    %v1704 = vunpack.c.h.b16 %v1154
    %v1705 = vunpack.c.l.b16 %v1155
    %v1706 = vunpack.c.h.b16 %v1155
    %v1707 = vunpack.c.l.b16 %v1156
    %v1708 = vunpack.c.h.b16 %v1156
    %v1709 = vunpack.c.l.b16 %v1157
    %v1710 = vunpack.c.h.b16 %v1157
    %v1711 = vunpack.c.l.b16 %v1158
    %v1712 = vunpack.c.h.b16 %v1158
    %v1713 = vunpack.c.l.b16 %v1159
    %v1714 = vunpack.c.h.b16 %v1159
    %v1715 = vunpack.c.l.b16 %v1160
    %v1716 = vunpack.c.h.b16 %v1160
    %v1717 = vunpack.c.l.b16 %v1161
    %v1718 = vunpack.c.h.b16 %v1161
    %v1719 = vunpack.c.l.b16 %v1162
    %v1720 = vunpack.c.h.b16 %v1162
    %v1721 = vunpack.c.l.b16 %v1163
    %v1722 = vunpack.c.h.b16 %v1163
    %v1723 = vunpack.c.l.b16 %v1164
    %v1724 = vunpack.c.h.b16 %v1164
    %v1725 = vunpack.c.l.b16 %v1165
    %v1726 = vunpack.c.h.b16 %v1165
    %v1727 = vunpack.c.l.b16 %v1166
    %v1728 = vunpack.c.h.b16 %v1166
    %v1729 = vunpack.c.l.b16 %v1167
    %v1730 = vunpack.c.h.b16 %v1167
    %v1731 = vunpack.c.l.b16 %v1168
    %v1732 = vunpack.c.h.b16 %v1168
    %v1733 = vunpack.c.l.b16 %v1169
    %v1734 = vunpack.c.h.b16 %v1169
    %v1735 = vunpack.c.l.b16 %v1170
    %v1736 = vunpack.c.h.b16 %v1170
    %v1737 = vunpack.c.l.b16 %v1171
    %v1738 = vunpack.c.h.b16 %v1171
    %v1739 = vunpack.c.l.b16 %v1172
    %v1740 = vunpack.c.h.b16 %v1172
    %v1741 = vunpack.c.l.b16 %v1173
    %v1742 = vunpack.c.h.b16 %v1173
    %v1743 = vunpack.c.l.b16 %v1174
    %v1744 = vunpack.c.h.b16 %v1174
    %v1745 = vunpack.c.l.b16 %v1175
    %v1746 = vunpack.c.h.b16 %v1175
    %v1747 = vunpack.c.l.b16 %v1176
    %v1748 = vunpack.c.h.b16 %v1176
    %v1749 = vunpack.c.l.b16 %v1177
    %v1750 = vunpack.c.h.b16 %v1177
    %v1751 = vunpack.c.l.b16 %v1178
    %v1752 = vunpack.c.h.b16 %v1178
    %v1753 = vunpack.c.l.b16 %v1179
    %v1754 = vunpack.c.h.b16 %v1179
    %v1755 = vunpack.c.l.b16 %v1180
    %v1756 = vunpack.c.h.b16 %v1180
    %v1757 = vunpack.c.l.b16 %v1181
    %v1758 = vunpack.c.h.b16 %v1181
    %v1759 = vunpack.c.l.b16 %v1182
    %v1760 = vunpack.c.h.b16 %v1182
    %v1761 = vunpack.c.l.b16 %v1183
    %v1762 = vunpack.c.h.b16 %v1183
    %v1763 = vunpack.c.l.b16 %v1184
    %v1764 = vunpack.c.h.b16 %v1184
    %v1765 = vunpack.c.l.b16 %v1185
    %v1766 = vunpack.c.h.b16 %v1185
    %v1767 = vunpack.c.l.b16 %v1186
    %v1768 = vunpack.c.h.b16 %v1186
    %v1769 = vunpack.c.l.b16 %v1187
    %v1770 = vunpack.c.h.b16 %v1187
    %v1771 = vunpack.c.l.b16 %v1188
    %v1772 = vunpack.c.h.b16 %v1188
    %v1773 = vunpack.c.l.b16 %v1189
    %v1774 = vunpack.c.h.b16 %v1189
    %v1775 = vunpack.c.l.b16 %v1190
    %v1776 = vunpack.c.h.b16 %v1190
    %v1777 = vunpack.c.l.b16 %v1191
    %v1778 = vunpack.c.h.b16 %v1191
    %v1779 = vunpack.c.l.b16 %v1192
    %v1780 = vunpack.c.h.b16 %v1192
    %v1781 = vunpack.c.l.b16 %v1193
    %v1782 = vunpack.c.h.b16 %v1193
    %v1783 = vunpack.c.l.b16 %v1194
    %v1784 = vunpack.c.h.b16 %v1194
    %v1785 = vunpack.c.l.b16 %v1195
    %v1786 = vunpack.c.h.b16 %v1195
    %v1787 = vunpack.c.l.b16 %v1196
    %v1788 = vunpack.c.h.b16 %v1196
    %v1789 = vunpack.c.l.b16 %v1197
    %v1790 = vunpack.c.h.b16 %v1197
    %v1791 = vunpack.c.l.b16 %v1198
    %v1792 = vunpack.c.h.b16 %v1198
    %v1793 = vunpack.c.l.b16 %v1199
    %v1794 = vunpack.c.h.b16 %v1199
    %v1795 = vunpack.c.l.b16 %v1200
    %v1796 = vunpack.c.h.b16 %v1200
    %v1797 = vunpack.c.l.b16 %v1201
    %v1798 = vunpack.c.h.b16 %v1201
    %v1799 = vunpack.c.l.b16 %v1202
    %v1800 = vunpack.c.h.b16 %v1202
    %v1801 = vunpack.c.l.b16 %v1203
    %v1802 = vunpack.c.h.b16 %v1203
    %v1803 = vunpack.c.l.b16 %v1204
    %v1804 = vunpack.c.h.b16 %v1204
    %v1805 = vunpack.c.l.b16 %v1205
    %v1806 = vunpack.c.h.b16 %v1205
    %v1807 = vunpack.c.l.b16 %v1206
    %v1808 = vunpack.c.h.b16 %v1206
    %v1809 = vunpack.c.l.b16 %v1207
    %v1810 = vunpack.c.h.b16 %v1207
    %v1811 = vunpack.c.l.b16 %v1208
    %v1812 = vunpack.c.h.b16 %v1208
    %v1813 = vunpack.c.l.b16 %v1209
    %v1814 = vunpack.c.h.b16 %v1209
    %v1815 = vunpack.c.l.b16 %v1210
    %v1816 = vunpack.c.h.b16 %v1210
    %v1817 = vunpack.c.l.b16 %v1211
    %v1818 = vunpack.c.h.b16 %v1211
    %v1819 = vunpack.c.l.b16 %v1212
    %v1820 = vunpack.c.h.b16 %v1212
    %v1821 = vunpack.c.l.b16 %v1213
    %v1822 = vunpack.c.h.b16 %v1213
    %v1823 = vunpack.c.l.b16 %v1214
    %v1824 = vunpack.c.h.b16 %v1214
    %v1825 = vunpack.c.l.b16 %v1215
    %v1826 = vunpack.c.h.b16 %v1215
    %v1827 = vunpack.c.l.b16 %v1216
    %v1828 = vunpack.c.h.b16 %v1216
    %v1829 = vunpack.c.l.b16 %v1217
    %v1830 = vunpack.c.h.b16 %v1217
    %v1831 = vunpack.c.l.b16 %v1218
    %v1832 = vunpack.c.h.b16 %v1218
    %v1833 = vunpack.c.l.b16 %v1219
    %v1834 = vunpack.c.h.b16 %v1219
    %v1835 = vunpack.c.l.b16 %v1220
    %v1836 = vunpack.c.h.b16 %v1220
    %v1837 = vunpack.c.l.b16 %v1221
    %v1838 = vunpack.c.h.b16 %v1221
    %v1839 = vunpack.c.l.b16 %v1222
    %v1840 = vunpack.c.h.b16 %v1222
    %v1841 = vunpack.c.l.b16 %v1223
    %v1842 = vunpack.c.h.b16 %v1223
    %v1843 = vunpack.c.l.b16 %v1224
    %v1844 = vunpack.c.h.b16 %v1224
    %v1845 = vunpack.c.l.b16 %v1225
    %v1846 = vunpack.c.h.b16 %v1225
    %v1847 = vunpack.c.l.b16 %v1226
    %v1848 = vunpack.c.h.b16 %v1226
    %v1849 = vunpack.c.l.b16 %v1227
    %v1850 = vunpack.c.h.b16 %v1227
    %v1851 = vunpack.c.l.b16 %v1228
    %v1852 = vunpack.c.h.b16 %v1228
    %v1853 = vunpack.c.l.b16 %v1229
    %v1854 = vunpack.c.h.b16 %v1229
    %v1855 = vunpack.c.l.b16 %v1230
    %v1856 = vunpack.c.h.b16 %v1230
    %v1857 = vunpack.c.l.b16 %v1231
    %v1858 = vunpack.c.h.b16 %v1231
    %v1859 = vunpack.c.l.b16 %v1232
    %v1860 = vunpack.c.h.b16 %v1232
    %v1861 = vunpack.c.l.b16 %v1233
    %v1862 = vunpack.c.h.b16 %v1233
    %v1863 = vunpack.c.l.b16 %v1234
    %v1864 = vunpack.c.h.b16 %v1234
    %v1865 = vunpack.c.l.b16 %v1235
    %v1866 = vunpack.c.h.b16 %v1235
    %v1867 = vunpack.c.l.b16 %v1236
    %v1868 = vunpack.c.h.b16 %v1236
    %v1869 = vunpack.c.l.b16 %v1237
    %v1870 = vunpack.c.h.b16 %v1237
    %v1871 = vunpack.c.l.b16 %v1238
    %v1872 = vunpack.c.h.b16 %v1238
    %v1873 = vunpack.c.l.b16 %v1239
    %v1874 = vunpack.c.h.b16 %v1239
    %v1875 = vunpack.c.l.b16 %v1240
    %v1876 = vunpack.c.h.b16 %v1240
    %v1877 = vunpack.c.l.b16 %v1241
    %v1878 = vunpack.c.h.b16 %v1241
    %v1879 = vunpack.c.l.b16 %v1242
    %v1880 = vunpack.c.h.b16 %v1242
    %v1881 = vunpack.c.l.b16 %v1243
    %v1882 = vunpack.c.h.b16 %v1243
    %v1883 = vunpack.c.l.b16 %v1244
    %v1884 = vunpack.c.h.b16 %v1244
    %v1885 = vunpack.c.l.b16 %v1245
    %v1886 = vunpack.c.h.b16 %v1245
    %v1887 = vunpack.c.l.b16 %v1246
    %v1888 = vunpack.c.h.b16 %v1246
    %v1889 = vunpack.c.l.b16 %v1247
    %v1890 = vunpack.c.h.b16 %v1247
    %v1891 = vunpack.c.l.b16 %v1248
    %v1892 = vunpack.c.h.b16 %v1248
    %v1893 = vunpack.c.l.b16 %v1249
    %v1894 = vunpack.c.h.b16 %v1249
    %v1895 = vunpack.c.l.b16 %v1250
    %v1896 = vunpack.c.h.b16 %v1250
    %v1897 = vunpack.c.l.b16 %v1251
    %v1898 = vunpack.c.h.b16 %v1251
    %v1899 = vunpack.c.l.b16 %v1252
    %v1900 = vunpack.c.h.b16 %v1252
    %v1901 = vunpack.c.l.b16 %v1253
    %v1902 = vunpack.c.h.b16 %v1253
    %v1903 = vunpack.c.l.b16 %v1254
    %v1904 = vunpack.c.h.b16 %v1254
    %v1905 = vunpack.c.l.b16 %v1255
    %v1906 = vunpack.c.h.b16 %v1255
    %v1907 = vunpack.c.l.b16 %v1256
    %v1908 = vunpack.c.h.b16 %v1256
    %v1909 = vunpack.c.l.b16 %v1257
    %v1910 = vunpack.c.h.b16 %v1257
    %v1911 = vunpack.c.l.b16 %v1258
    %v1912 = vunpack.c.h.b16 %v1258
    %v1913 = vunpack.c.l.b16 %v1259
    %v1914 = vunpack.c.h.b16 %v1259
    %v1915 = vunpack.c.l.b16 %v1260
    %v1916 = vunpack.c.h.b16 %v1260
    %v1917 = vunpack.c.l.b16 %v1261
    %v1918 = vunpack.c.h.b16 %v1261
    %v1919 = vunpack.c.l.b16 %v1262
    %v1920 = vunpack.c.h.b16 %v1262
    %v1921 = vunpack.c.l.b16 %v1263
    %v1922 = vunpack.c.h.b16 %v1263
    %v1923 = vunpack.c.l.b16 %v1264
    %v1924 = vunpack.c.h.b16 %v1264
    %v1925 = vunpack.c.l.b16 %v1265
    %v1926 = vunpack.c.h.b16 %v1265
    %v1927 = vunpack.c.l.b16 %v1266
    %v1928 = vunpack.c.h.b16 %v1266
    %v1929 = vunpack.c.l.b16 %v1267
    %v1930 = vunpack.c.h.b16 %v1267
    %v1931 = vunpack.c.l.b16 %v1268
    %v1932 = vunpack.c.h.b16 %v1268
    %v1933 = vunpack.c.l.b16 %v1269
    %v1934 = vunpack.c.h.b16 %v1269
    %v1935 = vunpack.c.l.b16 %v1270
    %v1936 = vunpack.c.h.b16 %v1270
    %v1937 = vunpack.c.l.b16 %v1271
    %v1938 = vunpack.c.h.b16 %v1271
    %v1939 = vunpack.c.l.b16 %v1272
    %v1940 = vunpack.c.h.b16 %v1272
    %v1941 = vunpack.c.l.b16 %v1273
    %v1942 = vunpack.c.h.b16 %v1273
    %v1943 = vunpack.c.l.b16 %v1274
    %v1944 = vunpack.c.h.b16 %v1274
    %v1945 = vunpack.c.l.b16 %v1275
    %v1946 = vunpack.c.h.b16 %v1275
    %v1947 = vunpack.c.l.b16 %v1276
    %v1948 = vunpack.c.h.b16 %v1276
    %v1949 = vunpack.c.l.b16 %v1277
    %v1950 = vunpack.c.h.b16 %v1277
    %v1951 = vunpack.c.l.b16 %v1278
    %v1952 = vunpack.c.h.b16 %v1278
    %v1953 = vunpack.c.l.b16 %v1279
    %v1954 = vunpack.c.h.b16 %v1279
    %v1955 = vunpack.c.l.b16 %v1280
    %v1956 = vunpack.c.h.b16 %v1280
    %v1957 = vunpack.c.l.b16 %v1281
    %v1958 = vunpack.c.h.b16 %v1281
    %v1959 = vunpack.c.l.b16 %v1282
    %v1960 = vunpack.c.h.b16 %v1282
    %v1961 = vunpack.c.l.b16 %v1283
    %v1962 = vunpack.c.h.b16 %v1283
    %v1963 = vunpack.c.l.b16 %v1284
    %v1964 = vunpack.c.h.b16 %v1284
    %v1965 = vunpack.c.l.b16 %v1285
    %v1966 = vunpack.c.h.b16 %v1285
    %v1967 = vunpack.c.l.b16 %v1286
    %v1968 = vunpack.c.h.b16 %v1286
    %v1969 = vunpack.c.l.b16 %v1287
    %v1970 = vunpack.c.h.b16 %v1287
    %v1971 = vunpack.c.l.b16 %v1288
    %v1972 = vunpack.c.h.b16 %v1288
    %v1973 = vunpack.c.l.b16 %v1289
    %v1974 = vunpack.c.h.b16 %v1289
    %v1975 = vunpack.c.l.b16 %v1290
    %v1976 = vunpack.c.h.b16 %v1290
    %v1977 = vunpack.c.l.b16 %v1291
    %v1978 = vunpack.c.h.b16 %v1291
    %v1979 = vunpack.c.l.b16 %v1292
    %v1980 = vunpack.c.h.b16 %v1292
    %v1981 = vunpack.c.l.b16 %v1293
    %v1982 = vunpack.c.h.b16 %v1293
    %v1983 = vunpack.c.l.b16 %v1294
    %v1984 = vunpack.c.h.b16 %v1294
    %v1985 = vunpack.c.l.b16 %v1295
    %v1986 = vunpack.c.h.b16 %v1295
    %v1987 = vunpack.c.l.b16 %v1296
    %v1988 = vunpack.c.h.b16 %v1296
    %v1989 = vunpack.c.l.b16 %v1297
    %v1990 = vunpack.c.h.b16 %v1297
    %v1991 = vunpack.c.l.b16 %v1298
    %v1992 = vunpack.c.h.b16 %v1298
    %v1993 = vunpack.c.l.b16 %v1299
    %v1994 = vunpack.c.h.b16 %v1299
    %v1995 = vunpack.c.l.b16 %v1300
    %v1996 = vunpack.c.h.b16 %v1300
    %v1997 = vunpack.c.l.b16 %v1301
    %v1998 = vunpack.c.h.b16 %v1301
    %v1999 = vunpack.c.l.b16 %v1302
    %v2000 = vunpack.c.h.b16 %v1302
    %v2001 = vunpack.c.l.b16 %v1303
    %v2002 = vunpack.c.h.b16 %v1303
    %v2003 = vunpack.c.l.b16 %v1304
    %v2004 = vunpack.c.h.b16 %v1304
    %v2005 = vunpack.c.l.b16 %v1305
    %v2006 = vunpack.c.h.b16 %v1305
    %v2007 = vunpack.c.l.b16 %v1306
    %v2008 = vunpack.c.h.b16 %v1306
    %v2009 = vunpack.c.l.b16 %v1307
    %v2010 = vunpack.c.h.b16 %v1307
    %v2011 = vunpack.c.l.b16 %v1308
    %v2012 = vunpack.c.h.b16 %v1308
    %v2013 = vunpack.c.l.b16 %v1309
    %v2014 = vunpack.c.h.b16 %v1309
    %v2015 = vunpack.c.l.b16 %v1310
    %v2016 = vunpack.c.h.b16 %v1310
    %v2017 = vunpack.c.l.b16 %v1311
    %v2018 = vunpack.c.h.b16 %v1311
    %v2019 = vunpack.c.l.b16 %v1312
    %v2020 = vunpack.c.h.b16 %v1312
    %v2021 = vunpack.c.l.b16 %v1313
    %v2022 = vunpack.c.h.b16 %v1313
    %v2023 = vunpack.c.l.b16 %v1314
    %v2024 = vunpack.c.h.b16 %v1314
    %v2025 = vunpack.c.l.b16 %v1315
    %v2026 = vunpack.c.h.b16 %v1315
    %v2027 = vunpack.c.l.b16 %v1316
    %v2028 = vunpack.c.h.b16 %v1316
    %v2029 = vunpack.c.l.b16 %v1317
    %v2030 = vunpack.c.h.b16 %v1317
    %v2031 = vunpack.c.l.b16 %v1318
    %v2032 = vunpack.c.h.b16 %v1318
    %v2033 = vunpack.c.l.b16 %v1319
    %v2034 = vunpack.c.h.b16 %v1319
    %v2035 = vunpack.c.l.b16 %v1320
    %v2036 = vunpack.c.h.b16 %v1320
    %v2037 = vunpack.c.l.b16 %v1321
    %v2038 = vunpack.c.h.b16 %v1321
    %v2039 = vunpack.c.l.b16 %v1322
    %v2040 = vunpack.c.h.b16 %v1322
    %v2041 = vunpack.c.l.b16 %v1323
    %v2042 = vunpack.c.h.b16 %v1323
    %v2043 = vunpack.c.l.b16 %v1324
    %v2044 = vunpack.c.h.b16 %v1324
    %v2045 = vunpack.c.l.b16 %v1325
    %v2046 = vunpack.c.h.b16 %v1325
    %v2047 = vunpack.c.l.b16 %v1326
    %v2048 = vunpack.c.h.b16 %v1326
    %v2049 = vunpack.c.l.b16 %v1327
    %v2050 = vunpack.c.h.b16 %v1327
    %v2051 = vunpack.c.l.b16 %v1328
    %v2052 = vunpack.c.h.b16 %v1328
    %v2053 = vunpack.c.l.b16 %v1329
    %v2054 = vunpack.c.h.b16 %v1329
    %v2055 = vunpack.c.l.b16 %v1330
    %v2056 = vunpack.c.h.b16 %v1330
    %v2057 = vunpack.c.l.b16 %v1331
    %v2058 = vunpack.c.h.b16 %v1331
    %v2059 = vunpack.c.l.b16 %v1332
    %v2060 = vunpack.c.h.b16 %v1332
    %v2061 = vunpack.c.l.b16 %v1333
    %v2062 = vunpack.c.h.b16 %v1333
    %v2063 = vunpack.c.l.b16 %v1334
    %v2064 = vunpack.c.h.b16 %v1334
    %v2065 = vunpack.c.l.b16 %v1335
    %v2066 = vunpack.c.h.b16 %v1335
    %v2067 = vunpack.c.l.b16 %v1336
    %v2068 = vunpack.c.h.b16 %v1336
    %v2069 = vunpack.c.l.b16 %v1337
    %v2070 = vunpack.c.h.b16 %v1337
    %v2071 = vunpack.c.l.b16 %v1338
    %v2072 = vunpack.c.h.b16 %v1338
    %v2073 = vunpack.c.l.b16 %v1339
    %v2074 = vunpack.c.h.b16 %v1339
    %v2075 = vunpack.c.l.b16 %v1340
    %v2076 = vunpack.c.h.b16 %v1340
    %v2077 = vunpack.c.l.b16 %v1341
    %v2078 = vunpack.c.h.b16 %v1341
    %v2079 = vunpack.c.l.b16 %v1342
    %v2080 = vunpack.c.h.b16 %v1342
    %v2081 = vunpack.c.l.b16 %v1343
    %v2082 = vunpack.c.h.b16 %v1343
    %v2083 = vunpack.c.l.b16 %v1344
    %v2084 = vunpack.c.h.b16 %v1344
    %v2085 = vunpack.c.l.b16 %v1345
    %v2086 = vunpack.c.h.b16 %v1345
    %v2087 = vunpack.c.l.b16 %v1346
    %v2088 = vunpack.c.h.b16 %v1346
    %v2089 = vunpack.c.l.b16 %v1347
    %v2090 = vunpack.c.h.b16 %v1347
    %v2091 = vunpack.c.l.b16 %v1348
    %v2092 = vunpack.c.h.b16 %v1348
    %v2093 = vunpack.c.l.b16 %v1349
    %v2094 = vunpack.c.h.b16 %v1349
    %v2095 = vunpack.c.l.b16 %v1350
    %v2096 = vunpack.c.h.b16 %v1350
    %v2097 = vunpack.c.l.b16 %v1351
    %v2098 = vunpack.c.h.b16 %v1351
    %v2099 = vunpack.c.l.b16 %v1352
    %v2100 = vunpack.c.h.b16 %v1352
    %v2101 = vunpack.c.l.b16 %v1353
    %v2102 = vunpack.c.h.b16 %v1353
    %v2103 = vunpack.c.l.b16 %v1354
    %v2104 = vunpack.c.h.b16 %v1354
    %v2105 = vunpack.c.l.b16 %v1355
    %v2106 = vunpack.c.h.b16 %v1355
    %v2107 = vunpack.c.l.b16 %v1356
    %v2108 = vunpack.c.h.b16 %v1356
    %v2109 = vunpack.c.l.b16 %v1357
    %v2110 = vunpack.c.h.b16 %v1357
    %v2111 = vunpack.c.l.b16 %v1358
    %v2112 = vunpack.c.h.b16 %v1358
    %v2113 = vunpack.c.l.b16 %v1359
    %v2114 = vunpack.c.h.b16 %v1359
    %v2115 = vunpack.c.l.b16 %v1360
    %v2116 = vunpack.c.h.b16 %v1360
    %v2117 = vunpack.c.l.b16 %v1361
    %v2118 = vunpack.c.h.b16 %v1361
    %v2119 = vunpack.c.l.b16 %v1362
    %v2120 = vunpack.c.h.b16 %v1362
    %v2121 = vunpack.c.l.b16 %v1363
    %v2122 = vunpack.c.h.b16 %v1363
    %v2123 = vunpack.c.l.b16 %v1364
    %v2124 = vunpack.c.h.b16 %v1364
    %v2125 = vunpack.c.l.b16 %v1365
    %v2126 = vunpack.c.h.b16 %v1365
    %v2127 = vunpack.c.l.b16 %v1366
    %v2128 = vunpack.c.h.b16 %v1366
    %v2129 = vunpack.c.l.b16 %v1367
    %v2130 = vunpack.c.h.b16 %v1367
    %v2131 = vunpack.c.l.b16 %v1368
    %v2132 = vunpack.c.h.b16 %v1368
    %v2133 = vunpack.c.l.b16 %v1369
    %v2134 = vunpack.c.h.b16 %v1369
    %v2135 = vunpack.c.l.b16 %v1370
    %v2136 = vunpack.c.h.b16 %v1370
    %v2137 = vunpack.c.l.b16 %v1371
    %v2138 = vunpack.c.h.b16 %v1371
    %v2139 = vunpack.c.l.b16 %v1372
    %v2140 = vunpack.c.h.b16 %v1372
    %v2141 = vpack.c.b16 %v1637, %v1629
    %v2142 = vpack.c.b16 %v1638, %v1630
    %v2143 = vpack.c.b16 %v1639, %v1631
    %v2144 = vpack.c.b16 %v1640, %v1632
    %v2145 = vpack.c.b16 %v1641, %v1633
    %v2146 = vpack.c.b16 %v1642, %v1634
    %v2147 = vpack.c.b16 %v1643, %v1635
    %v2148 = vpack.c.b16 %v1644, %v1636
    %v2149 = vpack.c.b16 %v1653, %v1645
    %v2150 = vpack.c.b16 %v1654, %v1646
    %v2151 = vpack.c.b16 %v1655, %v1647
    %v2152 = vpack.c.b16 %v1656, %v1648
    %v2153 = vpack.c.b16 %v1657, %v1649
    %v2154 = vpack.c.b16 %v1658, %v1650
    %v2155 = vpack.c.b16 %v1659, %v1651
    %v2156 = vpack.c.b16 %v1660, %v1652
    %v2157 = vpack.c.b16 %v1669, %v1661
    %v2158 = vpack.c.b16 %v1670, %v1662
    %v2159 = vpack.c.b16 %v1671, %v1663
    %v2160 = vpack.c.b16 %v1672, %v1664
    %v2161 = vpack.c.b16 %v1673, %v1665
    %v2162 = vpack.c.b16 %v1674, %v1666
    %v2163 = vpack.c.b16 %v1675, %v1667
    %v2164 = vpack.c.b16 %v1676, %v1668
    %v2165 = vpack.c.b16 %v1685, %v1677
    %v2166 = vpack.c.b16 %v1686, %v1678
    %v2167 = vpack.c.b16 %v1687, %v1679
    %v2168 = vpack.c.b16 %v1688, %v1680
    %v2169 = vpack.c.b16 %v1689, %v1681
    %v2170 = vpack.c.b16 %v1690, %v1682
    %v2171 = vpack.c.b16 %v1691, %v1683
    %v2172 = vpack.c.b16 %v1692, %v1684
    %v2173 = vpack.c.b16 %v1701, %v1693
    %v2174 = vpack.c.b16 %v1702, %v1694
    %v2175 = vpack.c.b16 %v1703, %v1695
    %v2176 = vpack.c.b16 %v1704, %v1696
    %v2177 = vpack.c.b16 %v1705, %v1697
    %v2178 = vpack.c.b16 %v1706, %v1698
    %v2179 = vpack.c.b16 %v1707, %v1699
    %v2180 = vpack.c.b16 %v1708, %v1700
    %v2181 = vpack.c.b16 %v1717, %v1709
    %v2182 = vpack.c.b16 %v1718, %v1710
    %v2183 = vpack.c.b16 %v1719, %v1711
    %v2184 = vpack.c.b16 %v1720, %v1712
    %v2185 = vpack.c.b16 %v1721, %v1713
    %v2186 = vpack.c.b16 %v1722, %v1714
    %v2187 = vpack.c.b16 %v1723, %v1715
    %v2188 = vpack.c.b16 %v1724, %v1716
    %v2189 = vpack.c.b16 %v1733, %v1725
    %v2190 = vpack.c.b16 %v1734, %v1726
    %v2191 = vpack.c.b16 %v1735, %v1727
    %v2192 = vpack.c.b16 %v1736, %v1728
    %v2193 = vpack.c.b16 %v1737, %v1729
    %v2194 = vpack.c.b16 %v1738, %v1730
    %v2195 = vpack.c.b16 %v1739, %v1731
    %v2196 = vpack.c.b16 %v1740, %v1732
    %v2197 = vpack.c.b16 %v1749, %v1741
    %v2198 = vpack.c.b16 %v1750, %v1742
    %v2199 = vpack.c.b16 %v1751, %v1743
    %v2200 = vpack.c.b16 %v1752, %v1744
    %v2201 = vpack.c.b16 %v1753, %v1745
    %v2202 = vpack.c.b16 %v1754, %v1746
    %v2203 = vpack.c.b16 %v1755, %v1747
    %v2204 = vpack.c.b16 %v1756, %v1748
    %v2205 = vpack.c.b16 %v1765, %v1757
    %v2206 = vpack.c.b16 %v1766, %v1758
    %v2207 = vpack.c.b16 %v1767, %v1759
    %v2208 = vpack.c.b16 %v1768, %v1760
    %v2209 = vpack.c.b16 %v1769, %v1761
    %v2210 = vpack.c.b16 %v1770, %v1762
    %v2211 = vpack.c.b16 %v1771, %v1763
    %v2212 = vpack.c.b16 %v1772, %v1764
    %v2213 = vpack.c.b16 %v1781, %v1773
    %v2214 = vpack.c.b16 %v1782, %v1774
    %v2215 = vpack.c.b16 %v1783, %v1775
    %v2216 = vpack.c.b16 %v1784, %v1776
    %v2217 = vpack.c.b16 %v1785, %v1777
    %v2218 = vpack.c.b16 %v1786, %v1778
    %v2219 = vpack.c.b16 %v1787, %v1779
    %v2220 = vpack.c.b16 %v1788, %v1780
    %v2221 = vpack.c.b16 %v1797, %v1789
    %v2222 = vpack.c.b16 %v1798, %v1790
    %v2223 = vpack.c.b16 %v1799, %v1791
    %v2224 = vpack.c.b16 %v1800, %v1792
    %v2225 = vpack.c.b16 %v1801, %v1793
    %v2226 = vpack.c.b16 %v1802, %v1794
    %v2227 = vpack.c.b16 %v1803, %v1795
    %v2228 = vpack.c.b16 %v1804, %v1796
    %v2229 = vpack.c.b16 %v1813, %v1805
    %v2230 = vpack.c.b16 %v1814, %v1806
    %v2231 = vpack.c.b16 %v1815, %v1807
    %v2232 = vpack.c.b16 %v1816, %v1808
    %v2233 = vpack.c.b16 %v1817, %v1809
    %v2234 = vpack.c.b16 %v1818, %v1810
    %v2235 = vpack.c.b16 %v1819, %v1811
    %v2236 = vpack.c.b16 %v1820, %v1812
    %v2237 = vpack.c.b16 %v1829, %v1821
    %v2238 = vpack.c.b16 %v1830, %v1822
    %v2239 = vpack.c.b16 %v1831, %v1823
    %v2240 = vpack.c.b16 %v1832, %v1824
    %v2241 = vpack.c.b16 %v1833, %v1825
    %v2242 = vpack.c.b16 %v1834, %v1826
    %v2243 = vpack.c.b16 %v1835, %v1827
    %v2244 = vpack.c.b16 %v1836, %v1828
    %v2245 = vpack.c.b16 %v1845, %v1837
    %v2246 = vpack.c.b16 %v1846, %v1838
    %v2247 = vpack.c.b16 %v1847, %v1839
    %v2248 = vpack.c.b16 %v1848, %v1840
    %v2249 = vpack.c.b16 %v1849, %v1841
    %v2250 = vpack.c.b16 %v1850, %v1842
    %v2251 = vpack.c.b16 %v1851, %v1843
    %v2252 = vpack.c.b16 %v1852, %v1844
    %v2253 = vpack.c.b16 %v1861, %v1853
    %v2254 = vpack.c.b16 %v1862, %v1854
    %v2255 = vpack.c.b16 %v1863, %v1855
    %v2256 = vpack.c.b16 %v1864, %v1856
    %v2257 = vpack.c.b16 %v1865, %v1857
    %v2258 = vpack.c.b16 %v1866, %v1858
    %v2259 = vpack.c.b16 %v1867, %v1859
    %v2260 = vpack.c.b16 %v1868, %v1860
    %v2261 = vpack.c.b16 %v1877, %v1869
    %v2262 = vpack.c.b16 %v1878, %v1870
    %v2263 = vpack.c.b16 %v1879, %v1871
    %v2264 = vpack.c.b16 %v1880, %v1872
    %v2265 = vpack.c.b16 %v1881, %v1873
    %v2266 = vpack.c.b16 %v1882, %v1874
    %v2267 = vpack.c.b16 %v1883, %v1875
    %v2268 = vpack.c.b16 %v1884, %v1876
    %v2269 = vpack.c.b16 %v1893, %v1885
    %v2270 = vpack.c.b16 %v1894, %v1886
    %v2271 = vpack.c.b16 %v1895, %v1887
    %v2272 = vpack.c.b16 %v1896, %v1888
    %v2273 = vpack.c.b16 %v1897, %v1889
    %v2274 = vpack.c.b16 %v1898, %v1890
    %v2275 = vpack.c.b16 %v1899, %v1891
    %v2276 = vpack.c.b16 %v1900, %v1892
    %v2277 = vpack.c.b16 %v1909, %v1901
    %v2278 = vpack.c.b16 %v1910, %v1902
    %v2279 = vpack.c.b16 %v1911, %v1903
    %v2280 = vpack.c.b16 %v1912, %v1904
    %v2281 = vpack.c.b16 %v1913, %v1905
    %v2282 = vpack.c.b16 %v1914, %v1906
    %v2283 = vpack.c.b16 %v1915, %v1907
    %v2284 = vpack.c.b16 %v1916, %v1908
    %v2285 = vpack.c.b16 %v1925, %v1917
    %v2286 = vpack.c.b16 %v1926, %v1918
    %v2287 = vpack.c.b16 %v1927, %v1919
    %v2288 = vpack.c.b16 %v1928, %v1920
    %v2289 = vpack.c.b16 %v1929, %v1921
    %v2290 = vpack.c.b16 %v1930, %v1922
    %v2291 = vpack.c.b16 %v1931, %v1923
    %v2292 = vpack.c.b16 %v1932, %v1924
    %v2293 = vpack.c.b16 %v1941, %v1933
    %v2294 = vpack.c.b16 %v1942, %v1934
    %v2295 = vpack.c.b16 %v1943, %v1935
    %v2296 = vpack.c.b16 %v1944, %v1936
    %v2297 = vpack.c.b16 %v1945, %v1937
    %v2298 = vpack.c.b16 %v1946, %v1938
    %v2299 = vpack.c.b16 %v1947, %v1939
    %v2300 = vpack.c.b16 %v1948, %v1940
    %v2301 = vpack.c.b16 %v1957, %v1949
    %v2302 = vpack.c.b16 %v1958, %v1950
    %v2303 = vpack.c.b16 %v1959, %v1951
    %v2304 = vpack.c.b16 %v1960, %v1952
    %v2305 = vpack.c.b16 %v1961, %v1953
    %v2306 = vpack.c.b16 %v1962, %v1954
    %v2307 = vpack.c.b16 %v1963, %v1955
    %v2308 = vpack.c.b16 %v1964, %v1956
    %v2309 = vpack.c.b16 %v1973, %v1965
    %v2310 = vpack.c.b16 %v1974, %v1966
    %v2311 = vpack.c.b16 %v1975, %v1967
    %v2312 = vpack.c.b16 %v1976, %v1968
    %v2313 = vpack.c.b16 %v1977, %v1969
    %v2314 = vpack.c.b16 %v1978, %v1970
    %v2315 = vpack.c.b16 %v1979, %v1971
    %v2316 = vpack.c.b16 %v1980, %v1972
    %v2317 = vpack.c.b16 %v1989, %v1981
    %v2318 = vpack.c.b16 %v1990, %v1982
    %v2319 = vpack.c.b16 %v1991, %v1983
    %v2320 = vpack.c.b16 %v1992, %v1984
    %v2321 = vpack.c.b16 %v1993, %v1985
    %v2322 = vpack.c.b16 %v1994, %v1986
    %v2323 = vpack.c.b16 %v1995, %v1987
    %v2324 = vpack.c.b16 %v1996, %v1988
    %v2325 = vpack.c.b16 %v2005, %v1997
    %v2326 = vpack.c.b16 %v2006, %v1998
    %v2327 = vpack.c.b16 %v2007, %v1999
    %v2328 = vpack.c.b16 %v2008, %v2000
    %v2329 = vpack.c.b16 %v2009, %v2001
    %v2330 = vpack.c.b16 %v2010, %v2002
    %v2331 = vpack.c.b16 %v2011, %v2003
    %v2332 = vpack.c.b16 %v2012, %v2004
    %v2333 = vpack.c.b16 %v2021, %v2013
    %v2334 = vpack.c.b16 %v2022, %v2014
    %v2335 = vpack.c.b16 %v2023, %v2015
    %v2336 = vpack.c.b16 %v2024, %v2016
    %v2337 = vpack.c.b16 %v2025, %v2017
    %v2338 = vpack.c.b16 %v2026, %v2018
    %v2339 = vpack.c.b16 %v2027, %v2019
    %v2340 = vpack.c.b16 %v2028, %v2020
    %v2341 = vpack.c.b16 %v2037, %v2029
    %v2342 = vpack.c.b16 %v2038, %v2030
    %v2343 = vpack.c.b16 %v2039, %v2031
    %v2344 = vpack.c.b16 %v2040, %v2032
    %v2345 = vpack.c.b16 %v2041, %v2033
    %v2346 = vpack.c.b16 %v2042, %v2034
    %v2347 = vpack.c.b16 %v2043, %v2035
    %v2348 = vpack.c.b16 %v2044, %v2036
    %v2349 = vpack.c.b16 %v2053, %v2045
    %v2350 = vpack.c.b16 %v2054, %v2046
    %v2351 = vpack.c.b16 %v2055, %v2047
    %v2352 = vpack.c.b16 %v2056, %v2048
    %v2353 = vpack.c.b16 %v2057, %v2049
    %v2354 = vpack.c.b16 %v2058, %v2050
    %v2355 = vpack.c.b16 %v2059, %v2051
    %v2356 = vpack.c.b16 %v2060, %v2052
    %v2357 = vpack.c.b16 %v2069, %v2061
    %v2358 = vpack.c.b16 %v2070, %v2062
    %v2359 = vpack.c.b16 %v2071, %v2063
    %v2360 = vpack.c.b16 %v2072, %v2064
    %v2361 = vpack.c.b16 %v2073, %v2065
    %v2362 = vpack.c.b16 %v2074, %v2066
    %v2363 = vpack.c.b16 %v2075, %v2067
    %v2364 = vpack.c.b16 %v2076, %v2068
    %v2365 = vpack.c.b16 %v2085, %v2077
    %v2366 = vpack.c.b16 %v2086, %v2078
    %v2367 = vpack.c.b16 %v2087, %v2079
    %v2368 = vpack.c.b16 %v2088, %v2080
    %v2369 = vpack.c.b16 %v2089, %v2081
    %v2370 = vpack.c.b16 %v2090, %v2082
    %v2371 = vpack.c.b16 %v2091, %v2083
    %v2372 = vpack.c.b16 %v2092, %v2084
    %v2373 = vpack.c.b16 %v2101, %v2093
    %v2374 = vpack.c.b16 %v2102, %v2094
    %v2375 = vpack.c.b16 %v2103, %v2095
    %v2376 = vpack.c.b16 %v2104, %v2096
    %v2377 = vpack.c.b16 %v2105, %v2097
    %v2378 = vpack.c.b16 %v2106, %v2098
    %v2379 = vpack.c.b16 %v2107, %v2099
    %v2380 = vpack.c.b16 %v2108, %v2100
    %v2381 = vpack.c.b16 %v2117, %v2109
    %v2382 = vpack.c.b16 %v2118, %v2110
    %v2383 = vpack.c.b16 %v2119, %v2111
    %v2384 = vpack.c.b16 %v2120, %v2112
    %v2385 = vpack.c.b16 %v2121, %v2113
    %v2386 = vpack.c.b16 %v2122, %v2114
    %v2387 = vpack.c.b16 %v2123, %v2115
    %v2388 = vpack.c.b16 %v2124, %v2116
    %v2389 = vpack.c.b16 %v2133, %v2125
    %v2390 = vpack.c.b16 %v2134, %v2126
    %v2391 = vpack.c.b16 %v2135, %v2127
    %v2392 = vpack.c.b16 %v2136, %v2128
    %v2393 = vpack.c.b16 %v2137, %v2129
    %v2394 = vpack.c.b16 %v2138, %v2130
    %v2395 = vpack.c.b16 %v2139, %v2131
    %v2396 = vpack.c.b16 %v2140, %v2132
    %2653 = vmatprep.subr.bf16.mxu0 %v2142
    %2654 = vmatpush1.bf16.msra.mxu0 %v2141
    %2655 = vmatprep.subr.bf16.mxu0 %v2150
    %2656 = vmatpush1.bf16.msra.mxu0 %v2149
    %2657 = vmatprep.subr.bf16.mxu0 %v2158
    %2658 = vmatpush1.bf16.msra.mxu0 %v2157
    %2659 = vmatprep.subr.bf16.mxu0 %v2166
    %2660 = vmatpush1.bf16.msra.mxu0 %v2165
    %2661 = vmatprep.subr.bf16.mxu0 %v2174
    %2662 = vmatpush1.bf16.msra.mxu0 %v2173
    %2663 = vmatprep.subr.bf16.mxu0 %v2182
    %2664 = vmatpush1.bf16.msra.mxu0 %v2181
    %2665 = vmatprep.subr.bf16.mxu0 %v2190
    %2666 = vmatpush1.bf16.msra.mxu0 %v2189
    %2667 = vmatprep.subr.bf16.mxu0 %v2198
    %2668 = vmatpush1.bf16.msra.mxu0 %v2197
    %2669 = vmatprep.subr.bf16.mxu0 %v2206
    %2670 = vmatpush1.bf16.msra.mxu0 %v2205
    %2671 = vmatprep.subr.bf16.mxu0 %v2214
    %2672 = vmatpush1.bf16.msra.mxu0 %v2213
    %2673 = vmatprep.subr.bf16.mxu0 %v2222
    %2674 = vmatpush1.bf16.msra.mxu0 %v2221
    %2675 = vmatprep.subr.bf16.mxu0 %v2230
    %2676 = vmatpush1.bf16.msra.mxu0 %v2229
    %2677 = vmatprep.subr.bf16.mxu0 %v2238
    %2678 = vmatpush1.bf16.msra.mxu0 %v2237
    %2679 = vmatprep.subr.bf16.mxu0 %v2246
    %2680 = vmatpush1.bf16.msra.mxu0 %v2245
    %2681 = vmatprep.subr.bf16.mxu0 %v2254
    %2682 = vmatpush1.bf16.msra.mxu0 %v2253
    %2683 = vmatprep.subr.bf16.mxu0 %v2262
    %2684 = vmatpush1.bf16.msra.mxu0 %v2261
    %2685 = vmatprep.mubr.bf16.mxu0 %v1114
    %2686 = vmatmul.mubr.bf16.gmra.mrb[0].mxu0 %v1113
    %v2687 = vpop.f32.mrb[0].mxu0
    %v2688 = vadd.f32 0.0, %v2687
    %v2689 = vpop.f32.mrb[0].mxu0
    %v2690 = vadd.f32 0.0, %v2689
    %v2691 = vpop.f32.mrb[0].mxu0
    %v2692 = vpop.f32.mrb[0].mxu0
    %2693 = vdwg.mxu0
    %2694 = vmatprep.subr.bf16.mxu0 %v2270
    %2695 = vmatpush1.bf16.msra.mxu0 %v2269
    %2696 = vmatprep.subr.bf16.mxu0 %v2278
    %2697 = vmatpush1.bf16.msra.mxu0 %v2277
    %2698 = vmatprep.subr.bf16.mxu0 %v2286
    %2699 = vmatpush1.bf16.msra.mxu0 %v2285
    %2700 = vmatprep.subr.bf16.mxu0 %v2294
    %2701 = vmatpush1.bf16.msra.mxu0 %v2293
    %2702 = vmatprep.subr.bf16.mxu0 %v2302
    %2703 = vmatpush1.bf16.msra.mxu0 %v2301
    %2704 = vmatprep.subr.bf16.mxu0 %v2310
    %2705 = vmatpush1.bf16.msra.mxu0 %v2309
    %2706 = vmatprep.subr.bf16.mxu0 %v2318
    %2707 = vmatpush1.bf16.msra.mxu0 %v2317
    %2708 = vmatprep.subr.bf16.mxu0 %v2326
    %2709 = vmatpush1.bf16.msra.mxu0 %v2325
    %2710 = vmatprep.subr.bf16.mxu0 %v2334
    %2711 = vmatpush1.bf16.msra.mxu0 %v2333
    %2712 = vmatprep.subr.bf16.mxu0 %v2342
    %2713 = vmatpush1.bf16.msra.mxu0 %v2341
    %2714 = vmatprep.subr.bf16.mxu0 %v2350
    %2715 = vmatpush1.bf16.msra.mxu0 %v2349
    %2716 = vmatprep.subr.bf16.mxu0 %v2358
    %2717 = vmatpush1.bf16.msra.mxu0 %v2357
    %2718 = vmatprep.subr.bf16.mxu0 %v2366
    %2719 = vmatpush1.bf16.msra.mxu0 %v2365
    %2720 = vmatprep.subr.bf16.mxu0 %v2374
    %2721 = vmatpush1.bf16.msra.mxu0 %v2373
    %2722 = vmatprep.subr.bf16.mxu0 %v2382
    %2723 = vmatpush1.bf16.msra.mxu0 %v2381
    %2724 = vmatprep.subr.bf16.mxu0 %v2390
    %2725 = vmatpush1.bf16.msra.mxu0 %v2389
    %2726 = vmatprep.mubr.bf16.mxu0 %v1116
    %2727 = vmatmul.mubr.bf16.gmra.mrb[0].mxu0 %v1115
    %v2728 = vpop.f32.mrb[0].mxu0
    %v2729 = vadd.f32 %v2688, %v2728
    %v2730 = vpop.f32.mrb[0].mxu0
    %v2731 = vadd.f32 %v2690, %v2730
    %v2732 = vpop.f32.mrb[0].mxu0
    %v2733 = vpop.f32.mrb[0].mxu0
    %2734 = vdwg.mxu0
    %2735 = vmatprep.subr.bf16.mxu0 %v2144
    %2736 = vmatpush1.bf16.msra.mxu0 %v2143
    %2737 = vmatprep.subr.bf16.mxu0 %v2152
    %2738 = vmatpush1.bf16.msra.mxu0 %v2151
    %2739 = vmatprep.subr.bf16.mxu0 %v2160
    %2740 = vmatpush1.bf16.msra.mxu0 %v2159
    %2741 = vmatprep.subr.bf16.mxu0 %v2168
    %2742 = vmatpush1.bf16.msra.mxu0 %v2167
    %2743 = vmatprep.subr.bf16.mxu0 %v2176
    %2744 = vmatpush1.bf16.msra.mxu0 %v2175
    %2745 = vmatprep.subr.bf16.mxu0 %v2184
    %2746 = vmatpush1.bf16.msra.mxu0 %v2183
    %2747 = vmatprep.subr.bf16.mxu0 %v2192
    %2748 = vmatpush1.bf16.msra.mxu0 %v2191
    %2749 = vmatprep.subr.bf16.mxu0 %v2200
    %2750 = vmatpush1.bf16.msra.mxu0 %v2199
    %2751 = vmatprep.subr.bf16.mxu0 %v2208
    %2752 = vmatpush1.bf16.msra.mxu0 %v2207
    %2753 = vmatprep.subr.bf16.mxu0 %v2216
    %2754 = vmatpush1.bf16.msra.mxu0 %v2215
    %2755 = vmatprep.subr.bf16.mxu0 %v2224
    %2756 = vmatpush1.bf16.msra.mxu0 %v2223
    %2757 = vmatprep.subr.bf16.mxu0 %v2232
    %2758 = vmatpush1.bf16.msra.mxu0 %v2231
    %2759 = vmatprep.subr.bf16.mxu0 %v2240
    %2760 = vmatpush1.bf16.msra.mxu0 %v2239
    %2761 = vmatprep.subr.bf16.mxu0 %v2248
    %2762 = vmatpush1.bf16.msra.mxu0 %v2247
    %2763 = vmatprep.subr.bf16.mxu0 %v2256
    %2764 = vmatpush1.bf16.msra.mxu0 %v2255
    %2765 = vmatprep.subr.bf16.mxu0 %v2264
    %2766 = vmatpush1.bf16.msra.mxu0 %v2263
    %2767 = vmatprep.mubr.bf16.mxu0 %v1114
    %2768 = vmatmul.mubr.bf16.gmra.mrb[0].mxu0 %v1113
    %v2769 = vpop.f32.mrb[0].mxu0
    %v2770 = vadd.f32 0.0, %v2769
    %v2771 = vpop.f32.mrb[0].mxu0
    %v2772 = vadd.f32 0.0, %v2771
    %v2773 = vpop.f32.mrb[0].mxu0
    %v2774 = vpop.f32.mrb[0].mxu0
    %2775 = vdwg.mxu0
    %2776 = vmatprep.subr.bf16.mxu0 %v2272
    %2777 = vmatpush1.bf16.msra.mxu0 %v2271
    %2778 = vmatprep.subr.bf16.mxu0 %v2280
    %2779 = vmatpush1.bf16.msra.mxu0 %v2279
    %2780 = vmatprep.subr.bf16.mxu0 %v2288
    %2781 = vmatpush1.bf16.msra.mxu0 %v2287
    %2782 = vmatprep.subr.bf16.mxu0 %v2296
    %2783 = vmatpush1.bf16.msra.mxu0 %v2295
    %2784 = vmatprep.subr.bf16.mxu0 %v2304
    %2785 = vmatpush1.bf16.msra.mxu0 %v2303
    %2786 = vmatprep.subr.bf16.mxu0 %v2312
    %2787 = vmatpush1.bf16.msra.mxu0 %v2311
    %2788 = vmatprep.subr.bf16.mxu0 %v2320
    %2789 = vmatpush1.bf16.msra.mxu0 %v2319
    %2790 = vmatprep.subr.bf16.mxu0 %v2328
    %2791 = vmatpush1.bf16.msra.mxu0 %v2327
    %2792 = vmatprep.subr.bf16.mxu0 %v2336
    %2793 = vmatpush1.bf16.msra.mxu0 %v2335
    %2794 = vmatprep.subr.bf16.mxu0 %v2344
    %2795 = vmatpush1.bf16.msra.mxu0 %v2343
    %2796 = vmatprep.subr.bf16.mxu0 %v2352
    %2797 = vmatpush1.bf16.msra.mxu0 %v2351
    %2798 = vmatprep.subr.bf16.mxu0 %v2360
    %2799 = vmatpush1.bf16.msra.mxu0 %v2359
    %2800 = vmatprep.subr.bf16.mxu0 %v2368
    %2801 = vmatpush1.bf16.msra.mxu0 %v2367
    %2802 = vmatprep.subr.bf16.mxu0 %v2376
    %2803 = vmatpush1.bf16.msra.mxu0 %v2375
    %2804 = vmatprep.subr.bf16.mxu0 %v2384
    %2805 = vmatpush1.bf16.msra.mxu0 %v2383
    %2806 = vmatprep.subr.bf16.mxu0 %v2392
    %2807 = vmatpush1.bf16.msra.mxu0 %v2391
    %2808 = vmatprep.mubr.bf16.mxu0 %v1116
    %2809 = vmatmul.mubr.bf16.gmra.mrb[0].mxu0 %v1115
    %v2810 = vpop.f32.mrb[0].mxu0
    %v2811 = vadd.f32 %v2770, %v2810
    %v2812 = vpop.f32.mrb[0].mxu0
    %v2813 = vadd.f32 %v2772, %v2812
    %v2814 = vpop.f32.mrb[0].mxu0
    %v2815 = vpop.f32.mrb[0].mxu0
    %2816 = vdwg.mxu0
    %2817 = vmatprep.subr.bf16.mxu0 %v2146
    %2818 = vmatpush1.bf16.msra.mxu0 %v2145
    %2819 = vmatprep.subr.bf16.mxu0 %v2154
    %2820 = vmatpush1.bf16.msra.mxu0 %v2153
    %2821 = vmatprep.subr.bf16.mxu0 %v2162
    %2822 = vmatpush1.bf16.msra.mxu0 %v2161
    %2823 = vmatprep.subr.bf16.mxu0 %v2170
    %2824 = vmatpush1.bf16.msra.mxu0 %v2169
    %2825 = vmatprep.subr.bf16.mxu0 %v2178
    %2826 = vmatpush1.bf16.msra.mxu0 %v2177
    %2827 = vmatprep.subr.bf16.mxu0 %v2186
    %2828 = vmatpush1.bf16.msra.mxu0 %v2185
    %2829 = vmatprep.subr.bf16.mxu0 %v2194
    %2830 = vmatpush1.bf16.msra.mxu0 %v2193
    %2831 = vmatprep.subr.bf16.mxu0 %v2202
    %2832 = vmatpush1.bf16.msra.mxu0 %v2201
    %2833 = vmatprep.subr.bf16.mxu0 %v2210
    %2834 = vmatpush1.bf16.msra.mxu0 %v2209
    %2835 = vmatprep.subr.bf16.mxu0 %v2218
    %2836 = vmatpush1.bf16.msra.mxu0 %v2217
    %2837 = vmatprep.subr.bf16.mxu0 %v2226
    %2838 = vmatpush1.bf16.msra.mxu0 %v2225
    %2839 = vmatprep.subr.bf16.mxu0 %v2234
    %2840 = vmatpush1.bf16.msra.mxu0 %v2233
    %2841 = vmatprep.subr.bf16.mxu0 %v2242
    %2842 = vmatpush1.bf16.msra.mxu0 %v2241
    %2843 = vmatprep.subr.bf16.mxu0 %v2250
    %2844 = vmatpush1.bf16.msra.mxu0 %v2249
    %2845 = vmatprep.subr.bf16.mxu0 %v2258
    %2846 = vmatpush1.bf16.msra.mxu0 %v2257
    %2847 = vmatprep.subr.bf16.mxu0 %v2266
    %2848 = vmatpush1.bf16.msra.mxu0 %v2265
    %2849 = vmatprep.mubr.bf16.mxu0 %v1114
    %2850 = vmatmul.mubr.bf16.gmra.mrb[0].mxu0 %v1113
    %v2851 = vpop.f32.mrb[0].mxu0
    %v2852 = vadd.f32 0.0, %v2851
    %v2853 = vpop.f32.mrb[0].mxu0
    %v2854 = vadd.f32 0.0, %v2853
    %v2855 = vpop.f32.mrb[0].mxu0
    %v2856 = vpop.f32.mrb[0].mxu0
    %2857 = vdwg.mxu0
    %2858 = vmatprep.subr.bf16.mxu0 %v2274
    %2859 = vmatpush1.bf16.msra.mxu0 %v2273
    %2860 = vmatprep.subr.bf16.mxu0 %v2282
    %2861 = vmatpush1.bf16.msra.mxu0 %v2281
    %2862 = vmatprep.subr.bf16.mxu0 %v2290
    %2863 = vmatpush1.bf16.msra.mxu0 %v2289
    %2864 = vmatprep.subr.bf16.mxu0 %v2298
    %2865 = vmatpush1.bf16.msra.mxu0 %v2297
    %2866 = vmatprep.subr.bf16.mxu0 %v2306
    %2867 = vmatpush1.bf16.msra.mxu0 %v2305
    %2868 = vmatprep.subr.bf16.mxu0 %v2314
    %2869 = vmatpush1.bf16.msra.mxu0 %v2313
    %2870 = vmatprep.subr.bf16.mxu0 %v2322
    %2871 = vmatpush1.bf16.msra.mxu0 %v2321
    %2872 = vmatprep.subr.bf16.mxu0 %v2330
    %2873 = vmatpush1.bf16.msra.mxu0 %v2329
    %2874 = vmatprep.subr.bf16.mxu0 %v2338
    %2875 = vmatpush1.bf16.msra.mxu0 %v2337
    %2876 = vmatprep.subr.bf16.mxu0 %v2346
    %2877 = vmatpush1.bf16.msra.mxu0 %v2345
    %2878 = vmatprep.subr.bf16.mxu0 %v2354
    %2879 = vmatpush1.bf16.msra.mxu0 %v2353
    %2880 = vmatprep.subr.bf16.mxu0 %v2362
    %2881 = vmatpush1.bf16.msra.mxu0 %v2361
    %2882 = vmatprep.subr.bf16.mxu0 %v2370
    %2883 = vmatpush1.bf16.msra.mxu0 %v2369
    %2884 = vmatprep.subr.bf16.mxu0 %v2378
    %2885 = vmatpush1.bf16.msra.mxu0 %v2377
    %2886 = vmatprep.subr.bf16.mxu0 %v2386
    %2887 = vmatpush1.bf16.msra.mxu0 %v2385
    %2888 = vmatprep.subr.bf16.mxu0 %v2394
    %2889 = vmatpush1.bf16.msra.mxu0 %v2393
    %2890 = vmatprep.mubr.bf16.mxu0 %v1116
    %2891 = vmatmul.mubr.bf16.gmra.mrb[0].mxu0 %v1115
    %v2892 = vpop.f32.mrb[0].mxu0
    %v2893 = vadd.f32 %v2852, %v2892
    %v2894 = vpop.f32.mrb[0].mxu0
    %v2895 = vadd.f32 %v2854, %v2894
    %v2896 = vpop.f32.mrb[0].mxu0
    %v2897 = vpop.f32.mrb[0].mxu0
    %2898 = vdwg.mxu0
    %2899 = vmatprep.subr.bf16.mxu0 %v2148
    %2900 = vmatpush1.bf16.msra.mxu0 %v2147
    %2901 = vmatprep.subr.bf16.mxu0 %v2156
    %2902 = vmatpush1.bf16.msra.mxu0 %v2155
    %2903 = vmatprep.subr.bf16.mxu0 %v2164
    %2904 = vmatpush1.bf16.msra.mxu0 %v2163
    %2905 = vmatprep.subr.bf16.mxu0 %v2172
    %2906 = vmatpush1.bf16.msra.mxu0 %v2171
    %2907 = vmatprep.subr.bf16.mxu0 %v2180
    %2908 = vmatpush1.bf16.msra.mxu0 %v2179
    %2909 = vmatprep.subr.bf16.mxu0 %v2188
    %2910 = vmatpush1.bf16.msra.mxu0 %v2187
    %2911 = vmatprep.subr.bf16.mxu0 %v2196
    %2912 = vmatpush1.bf16.msra.mxu0 %v2195
    %2913 = vmatprep.subr.bf16.mxu0 %v2204
    %2914 = vmatpush1.bf16.msra.mxu0 %v2203
    %2915 = vmatprep.subr.bf16.mxu0 %v2212
    %2916 = vmatpush1.bf16.msra.mxu0 %v2211
    %2917 = vmatprep.subr.bf16.mxu0 %v2220
    %2918 = vmatpush1.bf16.msra.mxu0 %v2219
    %2919 = vmatprep.subr.bf16.mxu0 %v2228
    %2920 = vmatpush1.bf16.msra.mxu0 %v2227
    %2921 = vmatprep.subr.bf16.mxu0 %v2236
    %2922 = vmatpush1.bf16.msra.mxu0 %v2235
    %2923 = vmatprep.subr.bf16.mxu0 %v2244
    %2924 = vmatpush1.bf16.msra.mxu0 %v2243
    %2925 = vmatprep.subr.bf16.mxu0 %v2252
    %2926 = vmatpush1.bf16.msra.mxu0 %v2251
    %2927 = vmatprep.subr.bf16.mxu0 %v2260
    %2928 = vmatpush1.bf16.msra.mxu0 %v2259
    %2929 = vmatprep.subr.bf16.mxu0 %v2268
    %2930 = vmatpush1.bf16.msra.mxu0 %v2267
    %2931 = vmatprep.mubr.bf16.mxu0 %v1114
    %2932 = vmatmul.mubr.bf16.gmra.mrb[0].mxu0 %v1113
    %v2933 = vpop.f32.mrb[0].mxu0
    %v2934 = vadd.f32 0.0, %v2933
    %v2935 = vpop.f32.mrb[0].mxu0
    %v2936 = vadd.f32 0.0, %v2935
    %v2937 = vpop.f32.mrb[0].mxu0
    %v2938 = vpop.f32.mrb[0].mxu0
    %2939 = vdwg.mxu0
    %2940 = vmatprep.subr.bf16.mxu0 %v2276
    %2941 = vmatpush1.bf16.msra.mxu0 %v2275
    %2942 = vmatprep.subr.bf16.mxu0 %v2284
    %2943 = vmatpush1.bf16.msra.mxu0 %v2283
    %2944 = vmatprep.subr.bf16.mxu0 %v2292
    %2945 = vmatpush1.bf16.msra.mxu0 %v2291
    %2946 = vmatprep.subr.bf16.mxu0 %v2300
    %2947 = vmatpush1.bf16.msra.mxu0 %v2299
    %2948 = vmatprep.subr.bf16.mxu0 %v2308
    %2949 = vmatpush1.bf16.msra.mxu0 %v2307
    %2950 = vmatprep.subr.bf16.mxu0 %v2316
    %2951 = vmatpush1.bf16.msra.mxu0 %v2315
    %2952 = vmatprep.subr.bf16.mxu0 %v2324
    %2953 = vmatpush1.bf16.msra.mxu0 %v2323
    %2954 = vmatprep.subr.bf16.mxu0 %v2332
    %2955 = vmatpush1.bf16.msra.mxu0 %v2331
    %2956 = vmatprep.subr.bf16.mxu0 %v2340
    %2957 = vmatpush1.bf16.msra.mxu0 %v2339
    %2958 = vmatprep.subr.bf16.mxu0 %v2348
    %2959 = vmatpush1.bf16.msra.mxu0 %v2347
    %2960 = vmatprep.subr.bf16.mxu0 %v2356
    %2961 = vmatpush1.bf16.msra.mxu0 %v2355
    %2962 = vmatprep.subr.bf16.mxu0 %v2364
    %2963 = vmatpush1.bf16.msra.mxu0 %v2363
    %2964 = vmatprep.subr.bf16.mxu0 %v2372
    %2965 = vmatpush1.bf16.msra.mxu0 %v2371
    %2966 = vmatprep.subr.bf16.mxu0 %v2380
    %2967 = vmatpush1.bf16.msra.mxu0 %v2379
    %2968 = vmatprep.subr.bf16.mxu0 %v2388
    %2969 = vmatpush1.bf16.msra.mxu0 %v2387
    %2970 = vmatprep.subr.bf16.mxu0 %v2396
    %2971 = vmatpush1.bf16.msra.mxu0 %v2395
    %2972 = vmatprep.mubr.bf16.mxu0 %v1116
    %2973 = vmatmul.mubr.bf16.gmra.mrb[0].mxu0 %v1115
    %v2974 = vpop.f32.mrb[0].mxu0
    %v2975 = vadd.f32 %v2934, %v2974
    %v2976 = vpop.f32.mrb[0].mxu0
    %v2977 = vadd.f32 %v2936, %v2976
    %v2978 = vpop.f32.mrb[0].mxu0
    %v2979 = vpop.f32.mrb[0].mxu0
    %2980 = vdwg.mxu0
    %v2981 = vld [vmem:[%s10] sm:$0xff]
    %v2982 = vld [vmem:[%s11] sm:$0xff]
    %v2983 = vrot.slane %v2729, 4
    %v2984 = vadd.f32 %v2729, %v2983
    %v2985 = vrot.slane %v2984, 2
    %v2986 = vadd.f32 %v2984, %v2985
    %v2987 = vrot.slane %v2986, 1
    %v2988 = vadd.f32 %v2986, %v2987
    %v2989 = vrot.slane %v2731, 4
    %v2990 = vadd.f32 %v2731, %v2989
    %v2991 = vrot.slane %v2990, 2
    %v2992 = vadd.f32 %v2990, %v2991
    %v2993 = vrot.slane %v2992, 1
    %v2994 = vadd.f32 %v2992, %v2993
    %v2995 = vrot.slane %v2811, 4
    %v2996 = vadd.f32 %v2811, %v2995
    %v2997 = vrot.slane %v2996, 2
    %v2998 = vadd.f32 %v2996, %v2997
    %v2999 = vrot.slane %v2998, 1
    %v3000 = vadd.f32 %v2998, %v2999
    %v3001 = vrot.slane %v2813, 4
    %v3002 = vadd.f32 %v2813, %v3001
    %v3003 = vrot.slane %v3002, 2
    %v3004 = vadd.f32 %v3002, %v3003
    %v3005 = vrot.slane %v3004, 1
    %v3006 = vadd.f32 %v3004, %v3005
    %v3007 = vrot.slane %v2893, 4
    %v3008 = vadd.f32 %v2893, %v3007
    %v3009 = vrot.slane %v3008, 2
    %v3010 = vadd.f32 %v3008, %v3009
    %v3011 = vrot.slane %v3010, 1
    %v3012 = vadd.f32 %v3010, %v3011
    %v3013 = vrot.slane %v2895, 4
    %v3014 = vadd.f32 %v2895, %v3013
    %v3015 = vrot.slane %v3014, 2
    %v3016 = vadd.f32 %v3014, %v3015
    %v3017 = vrot.slane %v3016, 1
    %v3018 = vadd.f32 %v3016, %v3017
    %v3019 = vrot.slane %v2975, 4
    %v3020 = vadd.f32 %v2975, %v3019
    %v3021 = vrot.slane %v3020, 2
    %v3022 = vadd.f32 %v3020, %v3021
    %v3023 = vrot.slane %v3022, 1
    %v3024 = vadd.f32 %v3022, %v3023
    %v3025 = vrot.slane %v2977, 4
    %v3026 = vadd.f32 %v2977, %v3025
    %v3027 = vrot.slane %v3026, 2
    %v3028 = vadd.f32 %v3026, %v3027
    %v3029 = vrot.slane %v3028, 1
    %v3030 = vadd.f32 %v3028, %v3029
    %v3031 = vmul.f32 %v2729, %v2729
    %v3032 = vmul.f32 %v2731, %v2731
    %v3033 = vmul.f32 %v2811, %v2811
    %v3034 = vmul.f32 %v2813, %v2813
    %v3035 = vmul.f32 %v2893, %v2893
    %v3036 = vmul.f32 %v2895, %v2895
    %v3037 = vmul.f32 %v2975, %v2975
    %v3038 = vmul.f32 %v2977, %v2977
    %v3039 = vrot.slane %v3031, 4
    %v3040 = vadd.f32 %v3031, %v3039
    %v3041 = vrot.slane %v3040, 2
    %v3042 = vadd.f32 %v3040, %v3041
    %v3043 = vrot.slane %v3042, 1
    %v3044 = vadd.f32 %v3042, %v3043
    %v3045 = vrot.slane %v3032, 4
    %v3046 = vadd.f32 %v3032, %v3045
    %v3047 = vrot.slane %v3046, 2
    %v3048 = vadd.f32 %v3046, %v3047
    %v3049 = vrot.slane %v3048, 1
    %v3050 = vadd.f32 %v3048, %v3049
    %v3051 = vrot.slane %v3033, 4
    %v3052 = vadd.f32 %v3033, %v3051
    %v3053 = vrot.slane %v3052, 2
    %v3054 = vadd.f32 %v3052, %v3053
    %v3055 = vrot.slane %v3054, 1
    %v3056 = vadd.f32 %v3054, %v3055
    %v3057 = vrot.slane %v3034, 4
    %v3058 = vadd.f32 %v3034, %v3057
    %v3059 = vrot.slane %v3058, 2
    %v3060 = vadd.f32 %v3058, %v3059
    %v3061 = vrot.slane %v3060, 1
    %v3062 = vadd.f32 %v3060, %v3061
    %v3063 = vrot.slane %v3035, 4
    %v3064 = vadd.f32 %v3035, %v3063
    %v3065 = vrot.slane %v3064, 2
    %v3066 = vadd.f32 %v3064, %v3065
    %v3067 = vrot.slane %v3066, 1
    %v3068 = vadd.f32 %v3066, %v3067
    %v3069 = vrot.slane %v3036, 4
    %v3070 = vadd.f32 %v3036, %v3069
    %v3071 = vrot.slane %v3070, 2
    %v3072 = vadd.f32 %v3070, %v3071
    %v3073 = vrot.slane %v3072, 1
    %v3074 = vadd.f32 %v3072, %v3073
    %v3075 = vrot.slane %v3037, 4
    %v3076 = vadd.f32 %v3037, %v3075
    %v3077 = vrot.slane %v3076, 2
    %v3078 = vadd.f32 %v3076, %v3077
    %v3079 = vrot.slane %v3078, 1
    %v3080 = vadd.f32 %v3078, %v3079
    %v3081 = vrot.slane %v3038, 4
    %v3082 = vadd.f32 %v3038, %v3081
    %v3083 = vrot.slane %v3082, 2
    %v3084 = vadd.f32 %v3082, %v3083
    %v3085 = vrot.slane %v3084, 1
    %v3086 = vadd.f32 %v3084, %v3085
    %v3087 = vmul.f32 %v2988, 0.125
    %v3088 = vmul.f32 %v2994, 0.125
    %v3089 = vmul.f32 %v3000, 0.125
    %v3090 = vmul.f32 %v3006, 0.125
    %v3091 = vmul.f32 %v3012, 0.125
    %v3092 = vmul.f32 %v3018, 0.125
    %v3093 = vmul.f32 %v3024, 0.125
    %v3094 = vmul.f32 %v3030, 0.125
    %v3095 = vmul.f32 %v3044, 0.125
    %v3096 = vmul.f32 %v3050, 0.125
    %v3097 = vmul.f32 %v3056, 0.125
    %v3098 = vmul.f32 %v3062, 0.125
    %v3099 = vmul.f32 %v3068, 0.125
    %v3100 = vmul.f32 %v3074, 0.125
    %v3101 = vmul.f32 %v3080, 0.125
    %v3102 = vmul.f32 %v3086, 0.125
    %v3103 = vmul.f32 %v3087, %v3087
    %v3104 = vmul.f32 %v3088, %v3088
    %v3105 = vmul.f32 %v3089, %v3089
    %v3106 = vmul.f32 %v3090, %v3090
    %v3107 = vmul.f32 %v3091, %v3091
    %v3108 = vmul.f32 %v3092, %v3092
    %v3109 = vmul.f32 %v3093, %v3093
    %v3110 = vmul.f32 %v3094, %v3094
    %v3111 = vsub.f32 %v3095, %v3103
    %v3112 = vsub.f32 %v3096, %v3104
    %v3113 = vsub.f32 %v3097, %v3105
    %v3114 = vsub.f32 %v3098, %v3106
    %v3115 = vsub.f32 %v3099, %v3107
    %v3116 = vsub.f32 %v3100, %v3108
    %v3117 = vsub.f32 %v3101, %v3109
    %v3118 = vsub.f32 %v3102, %v3110
    %v3119 = vadd.f32 %v3111, 0.8
    %v3120 = vadd.f32 %v3112, 0.8
    %v3121 = vadd.f32 %v3113, 0.8
    %v3122 = vadd.f32 %v3114, 0.8
    %v3123 = vadd.f32 %v3115, 0.8
    %v3124 = vadd.f32 %v3116, 0.8
    %v3125 = vadd.f32 %v3117, 0.8
    %v3126 = vadd.f32 %v3118, 0.8
    %v3127 = vrsqrt.pop %v3119
    %v3128 = vrsqrt.pop %v3120
    %v3129 = vrsqrt.pop %v3121
    %v3130 = vrsqrt.pop %v3122
    %v3131 = vrsqrt.pop %v3123
    %v3132 = vrsqrt.pop %v3124
    %v3133 = vrsqrt.pop %v3125
    %v3134 = vrsqrt.pop %v3126
    %v3143 = vcombine.low %v3127, %v3128
    %v3144 = vcombine.low %v3129, %v3130
    %v3145 = vcombine.low %v3131, %v3132
    %v3146 = vcombine.low %v3133, %v3134
    %v3148 = vunpack.c.l.s4 1966171168
    %v3149 = vunpack.c.0.s8 %v3148
    %v3150 = vlaneseq
    %v3151 = vshrl.u32 %v3150, 7
    %v3152 = vsub.s32 %v3149, %v3151
    %v3153 = vrot.slane %v3143, %v3152
    %v3155 = vunpack.c.l.s4 1966171168
    %v3156 = vunpack.c.0.s8 %v3155
    %v3157 = vlaneseq
    %v3158 = vshrl.u32 %v3157, 7
    %v3159 = vsub.s32 %v3156, %v3158
    %v3160 = vrot.slane %v3144, %v3159
    %v3162 = vunpack.c.l.s4 1966171168
    %v3163 = vunpack.c.0.s8 %v3162
    %v3164 = vlaneseq
    %v3165 = vshrl.u32 %v3164, 7
    %v3166 = vsub.s32 %v3163, %v3165
    %v3167 = vrot.slane %v3145, %v3166
    %v3169 = vunpack.c.l.s4 1966171168
    %v3170 = vunpack.c.0.s8 %v3169
    %v3171 = vlaneseq
    %v3172 = vshrl.u32 %v3171, 7
    %v3173 = vsub.s32 %v3170, %v3172
    %v3174 = vrot.slane %v3146, %v3173
    %v3175 = vcombine.low %v3153, %v3160
    %v3176 = vcombine.low %v3167, %v3174
    %v3178 = vunpack.c.l.s4 1966171168
    %v3179 = vunpack.c.0.s8 %v3178
    %v3180 = vlaneseq
    %v3181 = vshrl.u32 %v3180, 7
    %v3182 = vsub.s32 %v3179, %v3181
    %v3183 = vrot.slane %v3175, %v3182
    %v3185 = vunpack.c.l.s4 1966171168
    %v3186 = vunpack.c.0.s8 %v3185
    %v3187 = vlaneseq
    %v3188 = vshrl.u32 %v3187, 7
    %v3189 = vsub.s32 %v3186, %v3188
    %v3190 = vrot.slane %v3176, %v3189
    %v3191 = vcombine.low %v3183, %v3190
    %v3193 = vmul.f32 %v2981, %v3191
    %v3195 = vlaneseq
    %v3196 = vshrl.u32 %v3195, 7
    %v3197 = vsub.s32 0, %v3196
    %v3198 = vrot.slane %v3193, %v3197
    %v3199 = vlaneseq
    %v3200 = vshrl.u32 %v3199, 7
    %v3201 = vsub.s32 1, %v3200
    %v3202 = vrot.slane %v3193, %v3201
    %v3203 = vlaneseq
    %v3204 = vshrl.u32 %v3203, 7
    %v3205 = vsub.s32 2, %v3204
    %v3206 = vrot.slane %v3193, %v3205
    %v3207 = vlaneseq
    %v3208 = vshrl.u32 %v3207, 7
    %v3209 = vsub.s32 3, %v3208
    %v3210 = vrot.slane %v3193, %v3209
    %v3211 = vlaneseq
    %v3212 = vshrl.u32 %v3211, 7
    %v3213 = vsub.s32 4, %v3212
    %v3214 = vrot.slane %v3193, %v3213
    %v3215 = vlaneseq
    %v3216 = vshrl.u32 %v3215, 7
    %v3217 = vsub.s32 5, %v3216
    %v3218 = vrot.slane %v3193, %v3217
    %v3219 = vlaneseq
    %v3220 = vshrl.u32 %v3219, 7
    %v3221 = vsub.s32 6, %v3220
    %v3222 = vrot.slane %v3193, %v3221
    %v3223 = vlaneseq
    %v3224 = vshrl.u32 %v3223, 7
    %v3225 = vsub.s32 7, %v3224
    %v3226 = vrot.slane %v3193, %v3225
    %v3235 = vmul.f32 %v3087, %v3198
    %v3236 = vmul.f32 %v3088, %v3202
    %v3237 = vmul.f32 %v3089, %v3206
    %v3238 = vmul.f32 %v3090, %v3210
    %v3239 = vmul.f32 %v3091, %v3214
    %v3240 = vmul.f32 %v3092, %v3218
    %v3241 = vmul.f32 %v3093, %v3222
    %v3242 = vmul.f32 %v3094, %v3226
    %v3251 = vcombine.low %v3235, %v3236
    %v3252 = vcombine.low %v3237, %v3238
    %v3253 = vcombine.low %v3239, %v3240
    %v3254 = vcombine.low %v3241, %v3242
    %v3256 = vunpack.c.l.s4 1966171168
    %v3257 = vunpack.c.0.s8 %v3256
    %v3258 = vlaneseq
    %v3259 = vshrl.u32 %v3258, 7
    %v3260 = vsub.s32 %v3257, %v3259
    %v3261 = vrot.slane %v3251, %v3260
    %v3263 = vunpack.c.l.s4 1966171168
    %v3264 = vunpack.c.0.s8 %v3263
    %v3265 = vlaneseq
    %v3266 = vshrl.u32 %v3265, 7
    %v3267 = vsub.s32 %v3264, %v3266
    %v3268 = vrot.slane %v3252, %v3267
    %v3270 = vunpack.c.l.s4 1966171168
    %v3271 = vunpack.c.0.s8 %v3270
    %v3272 = vlaneseq
    %v3273 = vshrl.u32 %v3272, 7
    %v3274 = vsub.s32 %v3271, %v3273
    %v3275 = vrot.slane %v3253, %v3274
    %v3277 = vunpack.c.l.s4 1966171168
    %v3278 = vunpack.c.0.s8 %v3277
    %v3279 = vlaneseq
    %v3280 = vshrl.u32 %v3279, 7
    %v3281 = vsub.s32 %v3278, %v3280
    %v3282 = vrot.slane %v3254, %v3281
    %v3283 = vcombine.low %v3261, %v3268
    %v3284 = vcombine.low %v3275, %v3282
    %v3286 = vunpack.c.l.s4 1966171168
    %v3287 = vunpack.c.0.s8 %v3286
    %v3288 = vlaneseq
    %v3289 = vshrl.u32 %v3288, 7
    %v3290 = vsub.s32 %v3287, %v3289
    %v3291 = vrot.slane %v3283, %v3290
    %v3293 = vunpack.c.l.s4 1966171168
    %v3294 = vunpack.c.0.s8 %v3293
    %v3295 = vlaneseq
    %v3296 = vshrl.u32 %v3295, 7
    %v3297 = vsub.s32 %v3294, %v3296
    %v3298 = vrot.slane %v3284, %v3297
    %v3299 = vcombine.low %v3291, %v3298
    %v3301 = vsub.f32 %v2982, %v3299
    %v3302 = vmul.f32 %v2729, %v3198
    %v3303 = vmul.f32 %v2731, %v3202
    %v3304 = vmul.f32 %v2811, %v3206
    %v3305 = vmul.f32 %v2813, %v3210
    %v3306 = vmul.f32 %v2893, %v3214
    %v3307 = vmul.f32 %v2895, %v3218
    %v3308 = vmul.f32 %v2975, %v3222
    %v3309 = vmul.f32 %v2977, %v3226
    %v3311 = vlaneseq
    %v3312 = vshrl.u32 %v3311, 7
    %v3313 = vsub.s32 0, %v3312
    %v3314 = vrot.slane %v3301, %v3313
    %v3315 = vlaneseq
    %v3316 = vshrl.u32 %v3315, 7
    %v3317 = vsub.s32 1, %v3316
    %v3318 = vrot.slane %v3301, %v3317
    %v3319 = vlaneseq
    %v3320 = vshrl.u32 %v3319, 7
    %v3321 = vsub.s32 2, %v3320
    %v3322 = vrot.slane %v3301, %v3321
    %v3323 = vlaneseq
    %v3324 = vshrl.u32 %v3323, 7
    %v3325 = vsub.s32 3, %v3324
    %v3326 = vrot.slane %v3301, %v3325
    %v3327 = vlaneseq
    %v3328 = vshrl.u32 %v3327, 7
    %v3329 = vsub.s32 4, %v3328
    %v3330 = vrot.slane %v3301, %v3329
    %v3331 = vlaneseq
    %v3332 = vshrl.u32 %v3331, 7
    %v3333 = vsub.s32 5, %v3332
    %v3334 = vrot.slane %v3301, %v3333
    %v3335 = vlaneseq
    %v3336 = vshrl.u32 %v3335, 7
    %v3337 = vsub.s32 6, %v3336
    %v3338 = vrot.slane %v3301, %v3337
    %v3339 = vlaneseq
    %v3340 = vshrl.u32 %v3339, 7
    %v3341 = vsub.s32 7, %v3340
    %v3342 = vrot.slane %v3301, %v3341
    %v3351 = vadd.f32 %v3302, %v3314
    %v3352 = vadd.f32 %v3303, %v3318
    %v3353 = vadd.f32 %v3304, %v3322
    %v3354 = vadd.f32 %v3305, %v3326
    %v3355 = vadd.f32 %v3306, %v3330
    %v3356 = vadd.f32 %v3307, %v3334
    %v3357 = vadd.f32 %v3308, %v3338
    %v3358 = vadd.f32 %v3309, %v3342
    %vm3359 = vcmp.gt.f32.partialorder %v3351, 0.0
    %vm3360 = vcmp.gt.f32.partialorder %v3352, 0.0
    %vm3361 = vcmp.gt.f32.partialorder %v3353, 0.0
    %vm3362 = vcmp.gt.f32.partialorder %v3354, 0.0
    %vm3363 = vcmp.gt.f32.partialorder %v3355, 0.0
    %vm3364 = vcmp.gt.f32.partialorder %v3356, 0.0
    %vm3365 = vcmp.gt.f32.partialorder %v3357, 0.0
    %vm3366 = vcmp.gt.f32.partialorder %v3358, 0.0
    %v3367 = vmul.f32 %v3351, 0.2
    %v3368 = vmul.f32 %v3352, 0.2
    %v3369 = vmul.f32 %v3353, 0.2
    %v3370 = vmul.f32 %v3354, 0.2
    %v3371 = vmul.f32 %v3355, 0.2
    %v3372 = vmul.f32 %v3356, 0.2
    %v3373 = vmul.f32 %v3357, 0.2
    %v3374 = vmul.f32 %v3358, 0.2
    %v3375 = vsel %vm3359, %v3351, %v3367
    %v3376 = vsel %vm3360, %v3352, %v3368
    %v3377 = vsel %vm3361, %v3353, %v3369
    %v3378 = vsel %vm3362, %v3354, %v3370
    %v3379 = vsel %vm3363, %v3355, %v3371
    %v3380 = vsel %vm3364, %v3356, %v3372
    %v3381 = vsel %vm3365, %v3357, %v3373
    %v3382 = vsel %vm3366, %v3358, %v3374
    %v3383 = vpack.c.bf16 %v3375, %v3375
    %v3384 = vpack.c.bf16 %v3376, %v3376
    %v3385 = vpack.c.bf16 %v3377, %v3377
    %v3386 = vpack.c.bf16 %v3378, %v3378
    %v3387 = vpack.c.bf16 %v3379, %v3379
    %v3388 = vpack.c.bf16 %v3380, %v3380
    %v3389 = vpack.c.bf16 %v3381, %v3381
    %v3390 = vpack.c.bf16 %v3382, %v3382
    %v3399 = vunpack.c.l.b16 %v3383
    %v3400 = vunpack.c.l.b16 %v3384
    %v3401 = vunpack.c.l.b16 %v3385
    %v3402 = vunpack.c.l.b16 %v3386
    %v3403 = vunpack.c.l.b16 %v3387
    %v3404 = vunpack.c.l.b16 %v3388
    %v3405 = vunpack.c.l.b16 %v3389
    %v3406 = vunpack.c.l.b16 %v3390
    %v3407 = vpack.c.b16 %v3400, %v3399
    %v3408 = vpack.c.b16 %v3402, %v3401
    %v3409 = vpack.c.b16 %v3404, %v3403
    %v3410 = vpack.c.b16 %v3406, %v3405
    %3415 = vst [vmem:[#allocation14] sm:$0xff] %v3407
    %3416 = vst [vmem:[#allocation14 + $0x8] sm:$0xff] %v3408
    %3417 = vst [vmem:[#allocation14 + $0x10] sm:$0xff] %v3409
    %3418 = vst [vmem:[#allocation14 + $0x18] sm:$0xff] %v3410
    // Predicated region
    $region78: #{tpu_custom_call.1} parent=1 // pred_check
      _
    $region79: #{tpu_custom_call.1} parent=1 // pred_check_branch
      %3420 = sbr.rel (0) target = $region81
    $region80: #{tpu_custom_call.1} parent=1 // pred_region
      %s3422 = ssub.s32 512, 512
      %3423 = vsyncadd [#allocation4], %s3422
      %s3425 = sshll.u32 [#allocation14], 4
      %s3426 = int_to_ptr.vmem [resolvable:$true] %s3425
      %3428 = dma.vmem_to_hbm [thread:$0]  %s3426, 512, %s12, [#allocation4]
    $region81: #{tpu_custom_call.1} parent=1 // pred_fallthru
      _
    // Predicated region
    $region82: #{tpu_custom_call.1} parent=1 // pred_check
      _
    $region83: #{tpu_custom_call.1} parent=1 // pred_check_branch
      %3430 = sbr.rel (0) target = $region85
    $region84: #{tpu_custom_call.1} parent=1 // pred_region
      %3431 = dma.done [#allocation4], 512
    $region85: #{tpu_custom_call.1} parent=1 // pred_fallthru
      _
    %3432 = vsyncpa [#allocation3], 1
    %3433 = vsyncpa [#allocation6], 1
    %3434 = vsyncpa [#allocation9], 1
    %3435 = vsyncpa [#allocation12], 1
    %3436 = vsyncpa [#allocation4], 1

</llo_original>
